<compile_context>
chip_gen: v5e
topology: v5e:2x2
jax: 0.10.0
libtpu: 0.0.40
codegen_flags: <defaults>
</compile_context>

<pallas_src>
import math

import jax
import jax.numpy as jnp
from jax import lax
from jax.experimental import pallas as pl
from jax.experimental.pallas import tpu as pltpu

# ---- small Starcoder2-like config ----
T = 16                     # num tokens (prefill, single sequence)
H = 128                    # hidden_size (lane-dense output)
NUM_HEADS = 4              # num_attention_heads
NUM_KV_HEADS = 2           # num_key_value_heads (GQA)
HEAD_DIM = H // NUM_HEADS  # 32
INTER = 256                # intermediate_size
EPS = 1e-5                 # norm_epsilon
ROPE_THETA = 10000.0
Q_SIZE = NUM_HEADS * HEAD_DIM
KV_SIZE = NUM_KV_HEADS * HEAD_DIM
QKV_SIZE = Q_SIZE + 2 * KV_SIZE            # q, k, v
QKV_EXT_SIZE = QKV_SIZE + Q_SIZE + KV_SIZE  # + rotate_half(q), rotate_half(k)
SCALE = HEAD_DIM ** -0.5
NEG_BIG = -1e30            # finite additive mask value (no inf arithmetic)

# ---- advisory cost estimate for XLA scheduling around the custom call ----
_FLOPS = (2 * T * H * QKV_EXT_SIZE                       # fused qkv (+rot)
          + NUM_HEADS * (2 * T * T * HEAD_DIM) * 2       # qk^T + pv
          + 2 * T * Q_SIZE * H                           # o_proj
          + 2 * T * H * INTER + 2 * T * INTER * H)       # mlp
_TRANSCENDENTALS = NUM_HEADS * T * T + T * INTER + 4 * T
_BYTES = (2 * T * H * 4                                  # x in/out (f32)
          + T * (2 * Q_SIZE + 2 * KV_SIZE) * 4           # rope tables (f32)
          + (H * QKV_EXT_SIZE + Q_SIZE * H + 2 * H * INTER) * 2   # bf16 weights
          + (QKV_EXT_SIZE + 2 * H + INTER + 4 * H) * 4)  # biases + ln params


# ---- math helpers (pure jnp: usable both in-kernel and in the reference) ----
def _layernorm(x, w, b):
    mean = jnp.mean(x, axis=-1, keepdims=True)
    var = jnp.mean(jnp.square(x - mean), axis=-1, keepdims=True)
    return (x - mean) * lax.rsqrt(var + EPS) * w + b


def _gelu_tanh(x):
    c = math.sqrt(2.0 / math.pi)
    return 0.5 * x * (1.0 + jnp.tanh(c * (x + 0.044715 * x * x * x)))


def _rope_halves(positions):
    half = HEAD_DIM // 2
    inv_freq = 1.0 / (ROPE_THETA ** (jnp.arange(0, half, dtype=jnp.float32) / half))
    freqs = positions.astype(jnp.float32)[:, None] * inv_freq[None, :]   # [T, half]
    cos = jnp.concatenate([jnp.cos(freqs), jnp.cos(freqs)], axis=-1)     # [T, HEAD_DIM]
    sin = jnp.concatenate([jnp.sin(freqs), jnp.sin(freqs)], axis=-1)
    return cos, sin


def _rope_neox(xh, cos, sin):  # reference-only per-head rotation
    x1 = xh[:, : HEAD_DIM // 2]
    x2 = xh[:, HEAD_DIM // 2:]
    return xh * cos + jnp.concatenate([-x2, x1], axis=-1) * sin


def _rotate_half_matrices():
    """Block-diagonal signed-permutation matrices: x @ R == rotate_half(x)."""
    half = HEAD_DIM // 2
    r = jnp.zeros((HEAD_DIM, HEAD_DIM), jnp.float32)
    r = r.at[half:, :half].set(-jnp.eye(half, dtype=jnp.float32))
    r = r.at[:half, half:].set(jnp.eye(half, dtype=jnp.float32))
    rq = jnp.kron(jnp.eye(NUM_HEADS, dtype=jnp.float32), r)      # [Q_SIZE, Q_SIZE]
    rk = jnp.kron(jnp.eye(NUM_KV_HEADS, dtype=jnp.float32), r)   # [KV_SIZE, KV_SIZE]
    return rq, rk


# ---- the fused decoder-layer kernel ----
def decoder_layer_kernel(x_ref, cosq_ref, sinq_ref, cosk_ref, sink_ref,
                         ln1w_ref, ln1b_ref,
                         wqkv_ref, bqkv_ref, wo_ref, bo_ref,
                         ln2w_ref, ln2b_ref,
                         wfc_ref, bfc_ref, wcp_ref, bcp_ref,
                         o_ref):
    x = x_ref[...]

    # -------- input layernorm (f32) --------
    h = _layernorm(x, ln1w_ref[...], ln1b_ref[...])

    # -------- fused QKV (+ rotate_half) projection: bf16 ops, f32 acc -------
    qkvr = jnp.dot(h.astype(jnp.bfloat16), wqkv_ref[...],
                   preferred_element_type=jnp.float32) + bqkv_ref[...]
    q = qkvr[:, :Q_SIZE]
    k = qkvr[:, Q_SIZE:Q_SIZE + KV_SIZE]
    v = qkvr[:, Q_SIZE + KV_SIZE:QKV_SIZE]
    q_rot = qkvr[:, QKV_SIZE:QKV_SIZE + Q_SIZE]       # rotate_half(q), from MXU
    k_rot = qkvr[:, QKV_SIZE + Q_SIZE:]               # rotate_half(k), from MXU

    # -------- neox RoPE combine (scale folded into the q-side tables) -------
    q = (q * cosq_ref[...] + q_rot * sinq_ref[...]).astype(jnp.bfloat16)
    k = (k * cosk_ref[...] + k_rot * sink_ref[...]).astype(jnp.bfloat16)
    v = v.astype(jnp.bfloat16)

    # -------- causal mask generated in-kernel (no DMA'd [T,T] table) --------
    row = lax.broadcasted_iota(jnp.int32, (T, T), 0)
    col = lax.broadcasted_iota(jnp.int32, (T, T), 1)
    causal = col <= row

    # -------- per-head causal attention (GQA), assembled in registers -------
    heads_per_kv = NUM_HEADS // NUM_KV_HEADS
    out_heads = []
    for hh in range(NUM_HEADS):
        kvh = hh // heads_per_kv
        q_h = q[:, hh * HEAD_DIM:(hh + 1) * HEAD_DIM]
        k_h = k[:, kvh * HEAD_DIM:(kvh + 1) * HEAD_DIM]
        v_h = v[:, kvh * HEAD_DIM:(kvh + 1) * HEAD_DIM]

        s = jnp.dot(q_h, k_h.T, preferred_element_type=jnp.float32)
        s = jnp.where(causal, s, NEG_BIG)
        s = s - jnp.max(s, axis=-1, keepdims=True)
        p = jnp.exp(s)
        o_h = jnp.dot(p.astype(jnp.bfloat16), v_h,
                      preferred_element_type=jnp.float32)
        # Normalize the [T, HEAD_DIM] output (cheaper than the [T, T] probs),
        # using the EUP approx reciprocal instead of a VPU divide.
        o_h = o_h * pl.reciprocal(jnp.sum(p, axis=-1, keepdims=True), approx=True)
        out_heads.append(o_h.astype(jnp.bfloat16))

    attn = jnp.concatenate(out_heads, axis=-1)        # [T, Q_SIZE] bf16, in regs

    # -------- single o_proj matmul + residual --------
    attn_out = jnp.dot(attn, wo_ref[...],
                       preferred_element_type=jnp.float32) + bo_ref[...]
    x = x + attn_out

    # -------- post-attention layernorm + MLP (gelu tanh) + residual ---------
    h2 = _layernorm(x, ln2w_ref[...], ln2b_ref[...])
    f = jnp.dot(h2.astype(jnp.bfloat16), wfc_ref[...],
                preferred_element_type=jnp.float32) + bfc_ref[...]
    f = _gelu_tanh(f).astype(jnp.bfloat16)            # stays bf16 into c_proj
    m = jnp.dot(f, wcp_ref[...],
                preferred_element_type=jnp.float32) + bcp_ref[...]

    o_ref[...] = x + m


# ---- one-time host-side parameter preparation (outside the per-call path) --
def prepare_params(params):
    """Casts weights to bf16 once and folds rotate_half into the QKV weight."""
    (ln1w, ln1b, wqkv, bqkv, wo, bo, ln2w, ln2b, wfc, bfc, wcp, bcp) = params
    rq, rk = _rotate_half_matrices()

    wqkv_bf = wqkv.astype(jnp.bfloat16)
    wq = wqkv_bf[:, :Q_SIZE].astype(jnp.float32)
    wk = wqkv_bf[:, Q_SIZE:Q_SIZE + KV_SIZE].astype(jnp.float32)
    # R is a signed permutation, so (W.bf16 @ R).bf16 == column-permuted W.bf16.
    wq_rot = (wq @ rq).astype(jnp.bfloat16)
    wk_rot = (wk @ rk).astype(jnp.bfloat16)
    wqkv_ext = jnp.concatenate([wqkv_bf, wq_rot, wk_rot], axis=1)  # [H, QKV_EXT]

    bq = bqkv[:, :Q_SIZE]
    bk = bqkv[:, Q_SIZE:Q_SIZE + KV_SIZE]
    bqkv_ext = jnp.concatenate([bqkv, bq @ rq, bk @ rk], axis=1)   # [1, QKV_EXT]

    return (ln1w, ln1b, wqkv_ext, bqkv_ext,
            wo.astype(jnp.bfloat16), bo, ln2w, ln2b,
            wfc.astype(jnp.bfloat16), bfc,
            wcp.astype(jnp.bfloat16), bcp)


def _rope_tables(positions):
    cos, sin = _rope_halves(positions)                     # [T, HEAD_DIM]
    cos_q = jnp.tile(cos, (1, NUM_HEADS)) * SCALE          # fold attn scale into q
    sin_q = jnp.tile(sin, (1, NUM_HEADS)) * SCALE
    cos_k = jnp.tile(cos, (1, NUM_KV_HEADS))
    sin_k = jnp.tile(sin, (1, NUM_KV_HEADS))
    return cos_q, sin_q, cos_k, sin_k


@jax.jit
def starcoder2_decoder_layer(hidden_states, positions, prepared_params):
    cos_q, sin_q, cos_k, sin_k = _rope_tables(positions)

    inputs = (hidden_states, cos_q, sin_q, cos_k, sin_k) + tuple(prepared_params)

    return pl.pallas_call(
        decoder_layer_kernel,
        out_shape=jax.ShapeDtypeStruct((T, H), jnp.float32),
        in_specs=[pl.BlockSpec(memory_space=pltpu.MemorySpace.VMEM)] * len(inputs),
        out_specs=pl.BlockSpec(memory_space=pltpu.MemorySpace.VMEM),
        input_output_aliases={0: 0},                       # residual in-place
        cost_estimate=pl.CostEstimate(flops=_FLOPS,
                                      transcendentals=_TRANSCENDENTALS,
                                      bytes_accessed=_BYTES),
    )(*inputs)


# ---- pure-JAX reference (same math, no Pallas) ----
def reference(hidden_states, positions, params, matmul_dtype=jnp.float32):
    (ln1w, ln1b, wqkv, bqkv, wo, bo, ln2w, ln2b, wfc, bfc, wcp, bcp) = params

    def mm(a, b):  # matmul with (optionally) bf16 operands, f32 accumulation
        return jnp.dot(a.astype(matmul_dtype), b.astype(matmul_dtype),
                       preferred_element_type=jnp.float32)

    cos, sin = _rope_halves(positions)
    x = hidden_states
    h = _layernorm(x, ln1w, ln1b)
    qkv = mm(h, wqkv) + bqkv
    q, k, v = (qkv[:, :Q_SIZE], qkv[:, Q_SIZE:Q_SIZE + KV_SIZE],
               qkv[:, Q_SIZE + KV_SIZE:])
    row = jnp.arange(T)[:, None]
    col = jnp.arange(T)[None, :]
    mask = col <= row
    heads_per_kv = NUM_HEADS // NUM_KV_HEADS
    chunks = []
    for hh in range(NUM_HEADS):
        kvh = hh // heads_per_kv
        q_h = _rope_neox(q[:, hh * HEAD_DIM:(hh + 1) * HEAD_DIM], cos, sin)
        k_h = _rope_neox(k[:, kvh * HEAD_DIM:(kvh + 1) * HEAD_DIM], cos, sin)
        v_h = v[:, kvh * HEAD_DIM:(kvh + 1) * HEAD_DIM]
        s = mm(q_h, k_h.T) * SCALE
        s = jnp.where(mask, s, -jnp.inf)
        p = jax.nn.softmax(s, axis=-1)
        chunks.append(mm(p, v_h))
    attn = jnp.concatenate(chunks, axis=-1)
    x = x + (mm(attn, wo) + bo)
    h2 = _layernorm(x, ln2w, ln2b)
    f = _gelu_tanh(mm(h2, wfc) + bfc)
    return x + (mm(f, wcp) + bcp)


if __name__ == "__main__":
    key = jax.random.PRNGKey(0)
    ks = jax.random.split(key, 16)

    def init(k, shape, scale=0.02):
        return (scale * jax.random.normal(k, shape)).astype(jnp.float32)

    hidden_states = init(ks[0], (T, H), scale=1.0)
    positions = jnp.arange(T, dtype=jnp.int32)

    # Weights kept in bf16 (the kernel's matmul operand dtype); norm params /
    # biases in f32.  This mirrors "store weights in bf16 once" feedback.
    params = (
        jnp.ones((1, H), jnp.float32),                          # input_layernorm.weight
        jnp.zeros((1, H), jnp.float32),                         # input_layernorm.bias
        init(ks[1], (H, QKV_SIZE)).astype(jnp.bfloat16),        # qkv_proj.weight
        init(ks[2], (1, QKV_SIZE)),                             # qkv_proj.bias
        init(ks[3], (Q_SIZE, H)).astype(jnp.bfloat16),          # o_proj.weight
        init(ks[4], (1, H)),                                    # o_proj.bias
        jnp.ones((1, H), jnp.float32),                          # post_attention_layernorm.weight
        jnp.zeros((1, H), jnp.float32),                         # post_attention_layernorm.bias
        init(ks[5], (H, INTER)).astype(jnp.bfloat16),           # mlp.c_fc.weight
        init(ks[6], (1, INTER)),                                # mlp.c_fc.bias
        init(ks[7], (INTER, H)).astype(jnp.bfloat16),           # mlp.c_proj.weight
        init(ks[8], (1, H)),                                    # mlp.c_proj.bias
    )

    # One-time parameter prep (bf16 weights + rotate_half folded into QKV).
    prepared = jax.tree.map(jax.block_until_ready, prepare_params(params))

    # references (f32 golden and bf16-matmul mirror of the kernel's precision)
    ref_f32 = reference(hidden_states, positions, params, jnp.float32)
    ref_bf16 = reference(hidden_states, positions, params, jnp.bfloat16)

    out = starcoder2_decoder_layer(hidden_states, positions, prepared)
    out = jax.block_until_ready(out)

    assert out.shape == (T, H)
    err_bf16 = float(jnp.max(jnp.abs(out - ref_bf16)))
    err_f32 = float(jnp.max(jnp.abs(out - ref_f32)))
    assert jnp.allclose(out, ref_bf16, atol=5e-3, rtol=5e-3), \
        f"max abs err vs bf16-matmul reference = {err_bf16}"
    assert jnp.allclose(out, ref_f32, atol=3e-2, rtol=3e-2), \
        f"max abs err vs f32 reference = {err_f32}"

    print("KERNEL_OK")
</pallas_src>

<mosaic_0001>
module attributes {stable_mosaic.version = 11 : i64} {
  func.func @decoder_layer_kernel(%arg0: memref<16x128xf32, #tpu.memory_space<vmem>>, %arg1: memref<16x128xf32, #tpu.memory_space<vmem>>, %arg2: memref<16x128xf32, #tpu.memory_space<vmem>>, %arg3: memref<16x64xf32, #tpu.memory_space<vmem>>, %arg4: memref<16x64xf32, #tpu.memory_space<vmem>>, %arg5: memref<1x128xf32, #tpu.memory_space<vmem>>, %arg6: memref<1x128xf32, #tpu.memory_space<vmem>>, %arg7: memref<128x448xbf16, #tpu.memory_space<vmem>>, %arg8: memref<1x448xf32, #tpu.memory_space<vmem>>, %arg9: memref<128x128xbf16, #tpu.memory_space<vmem>>, %arg10: memref<1x128xf32, #tpu.memory_space<vmem>>, %arg11: memref<1x128xf32, #tpu.memory_space<vmem>>, %arg12: memref<1x128xf32, #tpu.memory_space<vmem>>, %arg13: memref<128x256xbf16, #tpu.memory_space<vmem>>, %arg14: memref<1x256xf32, #tpu.memory_space<vmem>>, %arg15: memref<256x128xbf16, #tpu.memory_space<vmem>>, %arg16: memref<1x128xf32, #tpu.memory_space<vmem>>, %arg17: memref<16x128xf32, #tpu.memory_space<vmem>>) attributes {dimension_semantics = [], scalar_prefetch = 0 : i64, scratch_operands = 0 : i64, tpu.core_type = #tpu.core_type<tc>} {
    %c0 = arith.constant 0 : index
    %c0_0 = arith.constant 0 : index
    %0 = vector.load %arg0[%c0, %c0_0] : memref<16x128xf32, #tpu.memory_space<vmem>>, vector<16x128xf32>
    %c0_1 = arith.constant 0 : index
    %c0_2 = arith.constant 0 : index
    %1 = vector.load %arg5[%c0_1, %c0_2] : memref<1x128xf32, #tpu.memory_space<vmem>>, vector<1x128xf32>
    %c0_3 = arith.constant 0 : index
    %c0_4 = arith.constant 0 : index
    %2 = vector.load %arg6[%c0_3, %c0_4] : memref<1x128xf32, #tpu.memory_space<vmem>>, vector<1x128xf32>
    %cst = arith.constant dense<0.000000e+00> : vector<16xf32>
    %3 = vector.multi_reduction <add>, %0, %cst [1] : vector<16x128xf32> to vector<16xf32>
    %4 = vector.shape_cast %3 : vector<16xf32> to vector<16x1xf32>
    %cst_5 = arith.constant 1.280000e+02 : f32
    %5 = vector.broadcast %cst_5 : f32 to vector<16x1xf32>
    %6 = arith.divf %4, %5 : vector<16x1xf32>
    %7 = vector.broadcast %6 : vector<16x1xf32> to vector<16x128xf32>
    %8 = arith.subf %0, %7 : vector<16x128xf32>
    %9 = arith.mulf %8, %8 : vector<16x128xf32>
    %cst_6 = arith.constant dense<0.000000e+00> : vector<16xf32>
    %10 = vector.multi_reduction <add>, %9, %cst_6 [1] : vector<16x128xf32> to vector<16xf32>
    %11 = vector.shape_cast %10 : vector<16xf32> to vector<16x1xf32>
    %cst_7 = arith.constant 1.280000e+02 : f32
    %12 = vector.broadcast %cst_7 : f32 to vector<16x1xf32>
    %13 = arith.divf %11, %12 : vector<16x1xf32>
    %14 = vector.broadcast %6 : vector<16x1xf32> to vector<16x128xf32>
    %15 = arith.subf %0, %14 : vector<16x128xf32>
    %cst_8 = arith.constant 9.99999974E-6 : f32
    %16 = vector.broadcast %cst_8 : f32 to vector<16x1xf32>
    %17 = arith.addf %13, %16 : vector<16x1xf32>
    %18 = math.rsqrt %17 : vector<16x1xf32>
    %19 = vector.broadcast %18 : vector<16x1xf32> to vector<16x128xf32>
    %20 = arith.mulf %15, %19 : vector<16x128xf32>
    %21 = vector.broadcast %1 : vector<1x128xf32> to vector<16x128xf32>
    %22 = arith.mulf %20, %21 : vector<16x128xf32>
    %23 = vector.broadcast %2 : vector<1x128xf32> to vector<16x128xf32>
    %24 = arith.addf %22, %23 : vector<16x128xf32>
    %25 = arith.truncf %24 : vector<16x128xf32> to vector<16x128xbf16>
    %c0_9 = arith.constant 0 : index
    %c0_10 = arith.constant 0 : index
    %26 = vector.load %arg7[%c0_9, %c0_10] : memref<128x448xbf16, #tpu.memory_space<vmem>>, vector<128x448xbf16>
    %cst_11 = arith.constant dense<0.000000e+00> : vector<16x448xf32>
    %27 = tpu.matmul %25, %26, %cst_11 {dimension_numbers = #tpu.dot_dimension_numbers<[1], [0], [0], [1], [0, 0, 1, 1], [], []>} : vector<16x128xbf16>, vector<128x448xbf16>, vector<16x448xf32> -> vector<16x448xf32>
    %c0_12 = arith.constant 0 : index
    %c0_13 = arith.constant 0 : index
    %28 = vector.load %arg8[%c0_12, %c0_13] : memref<1x448xf32, #tpu.memory_space<vmem>>, vector<1x448xf32>
    %29 = vector.broadcast %28 : vector<1x448xf32> to vector<16x448xf32>
    %30 = arith.addf %27, %29 : vector<16x448xf32>
    %31 = vector.extract_strided_slice %30 {offsets = [0, 0], sizes = [16, 128], strides = [1, 1]} : vector<16x448xf32> to vector<16x128xf32>
    %32 = vector.extract_strided_slice %30 {offsets = [0, 128], sizes = [16, 64], strides = [1, 1]} : vector<16x448xf32> to vector<16x64xf32>
    %33 = vector.extract_strided_slice %30 {offsets = [0, 192], sizes = [16, 64], strides = [1, 1]} : vector<16x448xf32> to vector<16x64xf32>
    %34 = vector.extract_strided_slice %30 {offsets = [0, 256], sizes = [16, 128], strides = [1, 1]} : vector<16x448xf32> to vector<16x128xf32>
    %35 = vector.extract_strided_slice %30 {offsets = [0, 384], sizes = [16, 64], strides = [1, 1]} : vector<16x448xf32> to vector<16x64xf32>
    %c0_14 = arith.constant 0 : index
    %c0_15 = arith.constant 0 : index
    %36 = vector.load %arg1[%c0_14, %c0_15] : memref<16x128xf32, #tpu.memory_space<vmem>>, vector<16x128xf32>
    %37 = arith.mulf %31, %36 : vector<16x128xf32>
    %c0_16 = arith.constant 0 : index
    %c0_17 = arith.constant 0 : index
    %38 = vector.load %arg2[%c0_16, %c0_17] : memref<16x128xf32, #tpu.memory_space<vmem>>, vector<16x128xf32>
    %39 = arith.mulf %34, %38 : vector<16x128xf32>
    %40 = arith.addf %37, %39 : vector<16x128xf32>
    %41 = arith.truncf %40 : vector<16x128xf32> to vector<16x128xbf16>
    %c0_18 = arith.constant 0 : index
    %c0_19 = arith.constant 0 : index
    %42 = vector.load %arg3[%c0_18, %c0_19] : memref<16x64xf32, #tpu.memory_space<vmem>>, vector<16x64xf32>
    %43 = arith.mulf %32, %42 : vector<16x64xf32>
    %c0_20 = arith.constant 0 : index
    %c0_21 = arith.constant 0 : index
    %44 = vector.load %arg4[%c0_20, %c0_21] : memref<16x64xf32, #tpu.memory_space<vmem>>, vector<16x64xf32>
    %45 = arith.mulf %35, %44 : vector<16x64xf32>
    %46 = arith.addf %43, %45 : vector<16x64xf32>
    %47 = arith.truncf %46 : vector<16x64xf32> to vector<16x64xbf16>
    %48 = arith.truncf %33 : vector<16x64xf32> to vector<16x64xbf16>
    %49 = tpu.iota {dimensions = array<i32: 0>} : vector<16x16xi32>
    %50 = tpu.iota {dimensions = array<i32: 1>} : vector<16x16xi32>
    %51 = arith.cmpi sle, %50, %49 : vector<16x16xi32>
    %52 = vector.extract_strided_slice %41 {offsets = [0, 0], sizes = [16, 32], strides = [1, 1]} : vector<16x128xbf16> to vector<16x32xbf16>
    %53 = vector.extract_strided_slice %47 {offsets = [0, 0], sizes = [16, 32], strides = [1, 1]} : vector<16x64xbf16> to vector<16x32xbf16>
    %54 = vector.extract_strided_slice %48 {offsets = [0, 0], sizes = [16, 32], strides = [1, 1]} : vector<16x64xbf16> to vector<16x32xbf16>
    %55 = tpu.transpose %53, [1, 0] : vector<16x32xbf16> -> vector<32x16xbf16>
    %cst_22 = arith.constant dense<0.000000e+00> : vector<16x16xf32>
    %56 = tpu.matmul %52, %55, %cst_22 {dimension_numbers = #tpu.dot_dimension_numbers<[1], [0], [0], [1], [0, 0, 1, 1], [], []>} : vector<16x32xbf16>, vector<32x16xbf16>, vector<16x16xf32> -> vector<16x16xf32>
    %cst_23 = arith.constant -1.000000e+30 : f32
    %57 = vector.broadcast %cst_23 : f32 to vector<16x16xf32>
    %58 = arith.select %51, %56, %57 : vector<16x16xi1>, vector<16x16xf32>
    %cst_24 = arith.constant dense<0xFF800000> : vector<16xf32>
    %59 = vector.multi_reduction <maximumf>, %58, %cst_24 [1] : vector<16x16xf32> to vector<16xf32>
    %60 = vector.shape_cast %59 : vector<16xf32> to vector<16x1xf32>
    %61 = vector.broadcast %60 : vector<16x1xf32> to vector<16x16xf32>
    %62 = arith.subf %58, %61 : vector<16x16xf32>
    %63 = math.exp %62 : vector<16x16xf32>
    %64 = arith.truncf %63 : vector<16x16xf32> to vector<16x16xbf16>
    %cst_25 = arith.constant dense<0.000000e+00> : vector<16x32xf32>
    %65 = tpu.matmul %64, %54, %cst_25 {dimension_numbers = #tpu.dot_dimension_numbers<[1], [0], [0], [1], [0, 0, 1, 1], [], []>} : vector<16x16xbf16>, vector<16x32xbf16>, vector<16x32xf32> -> vector<16x32xf32>
    %cst_26 = arith.constant dense<0.000000e+00> : vector<16xf32>
    %66 = vector.multi_reduction <add>, %63, %cst_26 [1] : vector<16x16xf32> to vector<16xf32>
    %67 = vector.shape_cast %66 : vector<16xf32> to vector<16x1xf32>
    %68 = tpu.reciprocal %67 {approx = true} : vector<16x1xf32> -> vector<16x1xf32>
    %69 = vector.broadcast %68 : vector<16x1xf32> to vector<16x32xf32>
    %70 = arith.mulf %65, %69 : vector<16x32xf32>
    %71 = arith.truncf %70 : vector<16x32xf32> to vector<16x32xbf16>
    %72 = vector.extract_strided_slice %41 {offsets = [0, 32], sizes = [16, 32], strides = [1, 1]} : vector<16x128xbf16> to vector<16x32xbf16>
    %73 = vector.extract_strided_slice %47 {offsets = [0, 0], sizes = [16, 32], strides = [1, 1]} : vector<16x64xbf16> to vector<16x32xbf16>
    %74 = vector.extract_strided_slice %48 {offsets = [0, 0], sizes = [16, 32], strides = [1, 1]} : vector<16x64xbf16> to vector<16x32xbf16>
    %75 = tpu.transpose %73, [1, 0] : vector<16x32xbf16> -> vector<32x16xbf16>
    %cst_27 = arith.constant dense<0.000000e+00> : vector<16x16xf32>
    %76 = tpu.matmul %72, %75, %cst_27 {dimension_numbers = #tpu.dot_dimension_numbers<[1], [0], [0], [1], [0, 0, 1, 1], [], []>} : vector<16x32xbf16>, vector<32x16xbf16>, vector<16x16xf32> -> vector<16x16xf32>
    %cst_28 = arith.constant -1.000000e+30 : f32
    %77 = vector.broadcast %cst_28 : f32 to vector<16x16xf32>
    %78 = arith.select %51, %76, %77 : vector<16x16xi1>, vector<16x16xf32>
    %cst_29 = arith.constant dense<0xFF800000> : vector<16xf32>
    %79 = vector.multi_reduction <maximumf>, %78, %cst_29 [1] : vector<16x16xf32> to vector<16xf32>
    %80 = vector.shape_cast %79 : vector<16xf32> to vector<16x1xf32>
    %81 = vector.broadcast %80 : vector<16x1xf32> to vector<16x16xf32>
    %82 = arith.subf %78, %81 : vector<16x16xf32>
    %83 = math.exp %82 : vector<16x16xf32>
    %84 = arith.truncf %83 : vector<16x16xf32> to vector<16x16xbf16>
    %cst_30 = arith.constant dense<0.000000e+00> : vector<16x32xf32>
    %85 = tpu.matmul %84, %74, %cst_30 {dimension_numbers = #tpu.dot_dimension_numbers<[1], [0], [0], [1], [0, 0, 1, 1], [], []>} : vector<16x16xbf16>, vector<16x32xbf16>, vector<16x32xf32> -> vector<16x32xf32>
    %cst_31 = arith.constant dense<0.000000e+00> : vector<16xf32>
    %86 = vector.multi_reduction <add>, %83, %cst_31 [1] : vector<16x16xf32> to vector<16xf32>
    %87 = vector.shape_cast %86 : vector<16xf32> to vector<16x1xf32>
    %88 = tpu.reciprocal %87 {approx = true} : vector<16x1xf32> -> vector<16x1xf32>
    %89 = vector.broadcast %88 : vector<16x1xf32> to vector<16x32xf32>
    %90 = arith.mulf %85, %89 : vector<16x32xf32>
    %91 = arith.truncf %90 : vector<16x32xf32> to vector<16x32xbf16>
    %92 = vector.extract_strided_slice %41 {offsets = [0, 64], sizes = [16, 32], strides = [1, 1]} : vector<16x128xbf16> to vector<16x32xbf16>
    %93 = vector.extract_strided_slice %47 {offsets = [0, 32], sizes = [16, 32], strides = [1, 1]} : vector<16x64xbf16> to vector<16x32xbf16>
    %94 = vector.extract_strided_slice %48 {offsets = [0, 32], sizes = [16, 32], strides = [1, 1]} : vector<16x64xbf16> to vector<16x32xbf16>
    %95 = tpu.transpose %93, [1, 0] : vector<16x32xbf16> -> vector<32x16xbf16>
    %cst_32 = arith.constant dense<0.000000e+00> : vector<16x16xf32>
    %96 = tpu.matmul %92, %95, %cst_32 {dimension_numbers = #tpu.dot_dimension_numbers<[1], [0], [0], [1], [0, 0, 1, 1], [], []>} : vector<16x32xbf16>, vector<32x16xbf16>, vector<16x16xf32> -> vector<16x16xf32>
    %cst_33 = arith.constant -1.000000e+30 : f32
    %97 = vector.broadcast %cst_33 : f32 to vector<16x16xf32>
    %98 = arith.select %51, %96, %97 : vector<16x16xi1>, vector<16x16xf32>
    %cst_34 = arith.constant dense<0xFF800000> : vector<16xf32>
    %99 = vector.multi_reduction <maximumf>, %98, %cst_34 [1] : vector<16x16xf32> to vector<16xf32>
    %100 = vector.shape_cast %99 : vector<16xf32> to vector<16x1xf32>
    %101 = vector.broadcast %100 : vector<16x1xf32> to vector<16x16xf32>
    %102 = arith.subf %98, %101 : vector<16x16xf32>
    %103 = math.exp %102 : vector<16x16xf32>
    %104 = arith.truncf %103 : vector<16x16xf32> to vector<16x16xbf16>
    %cst_35 = arith.constant dense<0.000000e+00> : vector<16x32xf32>
    %105 = tpu.matmul %104, %94, %cst_35 {dimension_numbers = #tpu.dot_dimension_numbers<[1], [0], [0], [1], [0, 0, 1, 1], [], []>} : vector<16x16xbf16>, vector<16x32xbf16>, vector<16x32xf32> -> vector<16x32xf32>
    %cst_36 = arith.constant dense<0.000000e+00> : vector<16xf32>
    %106 = vector.multi_reduction <add>, %103, %cst_36 [1] : vector<16x16xf32> to vector<16xf32>
    %107 = vector.shape_cast %106 : vector<16xf32> to vector<16x1xf32>
    %108 = tpu.reciprocal %107 {approx = true} : vector<16x1xf32> -> vector<16x1xf32>
    %109 = vector.broadcast %108 : vector<16x1xf32> to vector<16x32xf32>
    %110 = arith.mulf %105, %109 : vector<16x32xf32>
    %111 = arith.truncf %110 : vector<16x32xf32> to vector<16x32xbf16>
    %112 = vector.extract_strided_slice %41 {offsets = [0, 96], sizes = [16, 32], strides = [1, 1]} : vector<16x128xbf16> to vector<16x32xbf16>
    %113 = vector.extract_strided_slice %47 {offsets = [0, 32], sizes = [16, 32], strides = [1, 1]} : vector<16x64xbf16> to vector<16x32xbf16>
    %114 = vector.extract_strided_slice %48 {offsets = [0, 32], sizes = [16, 32], strides = [1, 1]} : vector<16x64xbf16> to vector<16x32xbf16>
    %115 = tpu.transpose %113, [1, 0] : vector<16x32xbf16> -> vector<32x16xbf16>
    %cst_37 = arith.constant dense<0.000000e+00> : vector<16x16xf32>
    %116 = tpu.matmul %112, %115, %cst_37 {dimension_numbers = #tpu.dot_dimension_numbers<[1], [0], [0], [1], [0, 0, 1, 1], [], []>} : vector<16x32xbf16>, vector<32x16xbf16>, vector<16x16xf32> -> vector<16x16xf32>
    %cst_38 = arith.constant -1.000000e+30 : f32
    %117 = vector.broadcast %cst_38 : f32 to vector<16x16xf32>
    %118 = arith.select %51, %116, %117 : vector<16x16xi1>, vector<16x16xf32>
    %cst_39 = arith.constant dense<0xFF800000> : vector<16xf32>
    %119 = vector.multi_reduction <maximumf>, %118, %cst_39 [1] : vector<16x16xf32> to vector<16xf32>
    %120 = vector.shape_cast %119 : vector<16xf32> to vector<16x1xf32>
    %121 = vector.broadcast %120 : vector<16x1xf32> to vector<16x16xf32>
    %122 = arith.subf %118, %121 : vector<16x16xf32>
    %123 = math.exp %122 : vector<16x16xf32>
    %124 = arith.truncf %123 : vector<16x16xf32> to vector<16x16xbf16>
    %cst_40 = arith.constant dense<0.000000e+00> : vector<16x32xf32>
    %125 = tpu.matmul %124, %114, %cst_40 {dimension_numbers = #tpu.dot_dimension_numbers<[1], [0], [0], [1], [0, 0, 1, 1], [], []>} : vector<16x16xbf16>, vector<16x32xbf16>, vector<16x32xf32> -> vector<16x32xf32>
    %cst_41 = arith.constant dense<0.000000e+00> : vector<16xf32>
    %126 = vector.multi_reduction <add>, %123, %cst_41 [1] : vector<16x16xf32> to vector<16xf32>
    %127 = vector.shape_cast %126 : vector<16xf32> to vector<16x1xf32>
    %128 = tpu.reciprocal %127 {approx = true} : vector<16x1xf32> -> vector<16x1xf32>
    %129 = vector.broadcast %128 : vector<16x1xf32> to vector<16x32xf32>
    %130 = arith.mulf %125, %129 : vector<16x32xf32>
    %131 = arith.truncf %130 : vector<16x32xf32> to vector<16x32xbf16>
    %132 = tpu.concatenate %71, %91, %111, %131 in 1 : vector<16x32xbf16>, vector<16x32xbf16>, vector<16x32xbf16>, vector<16x32xbf16> -> vector<16x128xbf16>
    %c0_42 = arith.constant 0 : index
    %c0_43 = arith.constant 0 : index
    %133 = vector.load %arg9[%c0_42, %c0_43] : memref<128x128xbf16, #tpu.memory_space<vmem>>, vector<128x128xbf16>
    %cst_44 = arith.constant dense<0.000000e+00> : vector<16x128xf32>
    %134 = tpu.matmul %132, %133, %cst_44 {dimension_numbers = #tpu.dot_dimension_numbers<[1], [0], [0], [1], [0, 0, 1, 1], [], []>} : vector<16x128xbf16>, vector<128x128xbf16>, vector<16x128xf32> -> vector<16x128xf32>
    %c0_45 = arith.constant 0 : index
    %c0_46 = arith.constant 0 : index
    %135 = vector.load %arg10[%c0_45, %c0_46] : memref<1x128xf32, #tpu.memory_space<vmem>>, vector<1x128xf32>
    %136 = vector.broadcast %135 : vector<1x128xf32> to vector<16x128xf32>
    %137 = arith.addf %134, %136 : vector<16x128xf32>
    %138 = arith.addf %0, %137 : vector<16x128xf32>
    %c0_47 = arith.constant 0 : index
    %c0_48 = arith.constant 0 : index
    %139 = vector.load %arg11[%c0_47, %c0_48] : memref<1x128xf32, #tpu.memory_space<vmem>>, vector<1x128xf32>
    %c0_49 = arith.constant 0 : index
    %c0_50 = arith.constant 0 : index
    %140 = vector.load %arg12[%c0_49, %c0_50] : memref<1x128xf32, #tpu.memory_space<vmem>>, vector<1x128xf32>
    %cst_51 = arith.constant dense<0.000000e+00> : vector<16xf32>
    %141 = vector.multi_reduction <add>, %138, %cst_51 [1] : vector<16x128xf32> to vector<16xf32>
    %142 = vector.shape_cast %141 : vector<16xf32> to vector<16x1xf32>
    %cst_52 = arith.constant 1.280000e+02 : f32
    %143 = vector.broadcast %cst_52 : f32 to vector<16x1xf32>
    %144 = arith.divf %142, %143 : vector<16x1xf32>
    %145 = vector.broadcast %144 : vector<16x1xf32> to vector<16x128xf32>
    %146 = arith.subf %138, %145 : vector<16x128xf32>
    %147 = arith.mulf %146, %146 : vector<16x128xf32>
    %cst_53 = arith.constant dense<0.000000e+00> : vector<16xf32>
    %148 = vector.multi_reduction <add>, %147, %cst_53 [1] : vector<16x128xf32> to vector<16xf32>
    %149 = vector.shape_cast %148 : vector<16xf32> to vector<16x1xf32>
    %cst_54 = arith.constant 1.280000e+02 : f32
    %150 = vector.broadcast %cst_54 : f32 to vector<16x1xf32>
    %151 = arith.divf %149, %150 : vector<16x1xf32>
    %152 = vector.broadcast %144 : vector<16x1xf32> to vector<16x128xf32>
    %153 = arith.subf %138, %152 : vector<16x128xf32>
    %cst_55 = arith.constant 9.99999974E-6 : f32
    %154 = vector.broadcast %cst_55 : f32 to vector<16x1xf32>
    %155 = arith.addf %151, %154 : vector<16x1xf32>
    %156 = math.rsqrt %155 : vector<16x1xf32>
    %157 = vector.broadcast %156 : vector<16x1xf32> to vector<16x128xf32>
    %158 = arith.mulf %153, %157 : vector<16x128xf32>
    %159 = vector.broadcast %139 : vector<1x128xf32> to vector<16x128xf32>
    %160 = arith.mulf %158, %159 : vector<16x128xf32>
    %161 = vector.broadcast %140 : vector<1x128xf32> to vector<16x128xf32>
    %162 = arith.addf %160, %161 : vector<16x128xf32>
    %163 = arith.truncf %162 : vector<16x128xf32> to vector<16x128xbf16>
    %c0_56 = arith.constant 0 : index
    %c0_57 = arith.constant 0 : index
    %164 = vector.load %arg13[%c0_56, %c0_57] : memref<128x256xbf16, #tpu.memory_space<vmem>>, vector<128x256xbf16>
    %cst_58 = arith.constant dense<0.000000e+00> : vector<16x256xf32>
    %165 = tpu.matmul %163, %164, %cst_58 {dimension_numbers = #tpu.dot_dimension_numbers<[1], [0], [0], [1], [0, 0, 1, 1], [], []>} : vector<16x128xbf16>, vector<128x256xbf16>, vector<16x256xf32> -> vector<16x256xf32>
    %c0_59 = arith.constant 0 : index
    %c0_60 = arith.constant 0 : index
    %166 = vector.load %arg14[%c0_59, %c0_60] : memref<1x256xf32, #tpu.memory_space<vmem>>, vector<1x256xf32>
    %167 = vector.broadcast %166 : vector<1x256xf32> to vector<16x256xf32>
    %168 = arith.addf %165, %167 : vector<16x256xf32>
    %cst_61 = arith.constant 5.000000e-01 : f32
    %169 = vector.broadcast %cst_61 : f32 to vector<16x256xf32>
    %170 = arith.mulf %169, %168 : vector<16x256xf32>
    %cst_62 = arith.constant 4.471500e-02 : f32
    %171 = vector.broadcast %cst_62 : f32 to vector<16x256xf32>
    %172 = arith.mulf %171, %168 : vector<16x256xf32>
    %173 = arith.mulf %172, %168 : vector<16x256xf32>
    %174 = arith.mulf %173, %168 : vector<16x256xf32>
    %175 = arith.addf %168, %174 : vector<16x256xf32>
    %cst_63 = arith.constant 0.797884583 : f32
    %176 = vector.broadcast %cst_63 : f32 to vector<16x256xf32>
    %177 = arith.mulf %176, %175 : vector<16x256xf32>
    %178 = math.tanh %177 : vector<16x256xf32>
    %cst_64 = arith.constant 1.000000e+00 : f32
    %179 = vector.broadcast %cst_64 : f32 to vector<16x256xf32>
    %180 = arith.addf %179, %178 : vector<16x256xf32>
    %181 = arith.mulf %170, %180 : vector<16x256xf32>
    %182 = arith.truncf %181 : vector<16x256xf32> to vector<16x256xbf16>
    %c0_65 = arith.constant 0 : index
    %c0_66 = arith.constant 0 : index
    %183 = vector.load %arg15[%c0_65, %c0_66] : memref<256x128xbf16, #tpu.memory_space<vmem>>, vector<256x128xbf16>
    %cst_67 = arith.constant dense<0.000000e+00> : vector<16x128xf32>
    %184 = tpu.matmul %182, %183, %cst_67 {dimension_numbers = #tpu.dot_dimension_numbers<[1], [0], [0], [1], [0, 0, 1, 1], [], []>} : vector<16x256xbf16>, vector<256x128xbf16>, vector<16x128xf32> -> vector<16x128xf32>
    %c0_68 = arith.constant 0 : index
    %c0_69 = arith.constant 0 : index
    %185 = vector.load %arg16[%c0_68, %c0_69] : memref<1x128xf32, #tpu.memory_space<vmem>>, vector<1x128xf32>
    %186 = vector.broadcast %185 : vector<1x128xf32> to vector<16x128xf32>
    %187 = arith.addf %184, %186 : vector<16x128xf32>
    %188 = arith.addf %138, %187 : vector<16x128xf32>
    %c0_70 = arith.constant 0 : index
    %c0_71 = arith.constant 0 : index
    %189 = vector.load %arg17[%c0_70, %c0_71] : memref<16x128xf32, #tpu.memory_space<vmem>>, vector<16x128xf32>
    tpu.vector_store %arg17[%c0_70, %c0_71], %188 {strides = array<i32>} : memref<16x128xf32, #tpu.memory_space<vmem>>, vector<16x128xf32>,
    return
  }
}

</mosaic_0001>

<llo_original>
// kernel: tile.39
$region0: #{tile.39}
  %s0 = inlined_call_operand.vmem [shape: f32[16,2,32], index: 0, kind: input, shape index: {}]
  %s1 = inlined_call_operand.vmem [shape: f32[16,64], index: 1, kind: output, shape index: {}]
  $region1: #{tile.39} parent=0
    #allocation0 [shape = 'u8[65536]{0}', space=vmem, size = 0x10000, scoped, tag = 'scoped mem for input reshape']
    %s3 = ssub.s32 4, 1
    %s4 = scalar_lea.vmem %s0, 30
    %v5 = vld [vmem:[%s4] sm:%s3]
    %s6 = scalar_lea.vmem [#allocation0], 120
    %7 = vst [vmem:[%s6] sm:%s3] %v5
    %s8 = scalar_lea.vmem %s0, 28
    %v9 = vld [vmem:[%s8] sm:%s3]
    %s10 = scalar_lea.vmem [#allocation0], 112
    %11 = vst [vmem:[%s10] sm:%s3] %v9
    %s12 = scalar_lea.vmem %s0, 26
    %v13 = vld [vmem:[%s12] sm:%s3]
    %s14 = scalar_lea.vmem [#allocation0], 104
    %15 = vst [vmem:[%s14] sm:%s3] %v13
    %s16 = scalar_lea.vmem %s0, 24
    %v17 = vld [vmem:[%s16] sm:%s3]
    %s18 = scalar_lea.vmem [#allocation0], 96
    %19 = vst [vmem:[%s18] sm:%s3] %v17
    %s20 = scalar_lea.vmem %s0, 22
    %v21 = vld [vmem:[%s20] sm:%s3]
    %s22 = scalar_lea.vmem [#allocation0], 88
    %23 = vst [vmem:[%s22] sm:%s3] %v21
    %s24 = scalar_lea.vmem %s0, 20
    %v25 = vld [vmem:[%s24] sm:%s3]
    %s26 = scalar_lea.vmem [#allocation0], 80
    %27 = vst [vmem:[%s26] sm:%s3] %v25
    %s28 = scalar_lea.vmem %s0, 18
    %v29 = vld [vmem:[%s28] sm:%s3]
    %s30 = scalar_lea.vmem [#allocation0], 72
    %31 = vst [vmem:[%s30] sm:%s3] %v29
    %s32 = scalar_lea.vmem %s0, 16
    %v33 = vld [vmem:[%s32] sm:%s3]
    %s34 = scalar_lea.vmem [#allocation0], 64
    %35 = vst [vmem:[%s34] sm:%s3] %v33
    %s36 = scalar_lea.vmem %s0, 14
    %v37 = vld [vmem:[%s36] sm:%s3]
    %s38 = scalar_lea.vmem [#allocation0], 56
    %39 = vst [vmem:[%s38] sm:%s3] %v37
    %s40 = scalar_lea.vmem %s0, 12
    %v41 = vld [vmem:[%s40] sm:%s3]
    %s42 = scalar_lea.vmem [#allocation0], 48
    %43 = vst [vmem:[%s42] sm:%s3] %v41
    %s44 = scalar_lea.vmem %s0, 10
    %v45 = vld [vmem:[%s44] sm:%s3]
    %s46 = scalar_lea.vmem [#allocation0], 40
    %47 = vst [vmem:[%s46] sm:%s3] %v45
    %s48 = scalar_lea.vmem %s0, 8
    %v49 = vld [vmem:[%s48] sm:%s3]
    %s50 = scalar_lea.vmem [#allocation0], 32
    %51 = vst [vmem:[%s50] sm:%s3] %v49
    %s52 = scalar_lea.vmem %s0, 6
    %v53 = vld [vmem:[%s52] sm:%s3]
    %s54 = scalar_lea.vmem [#allocation0], 24
    %55 = vst [vmem:[%s54] sm:%s3] %v53
    %s56 = scalar_lea.vmem %s0, 4
    %v57 = vld [vmem:[%s56] sm:%s3]
    %s58 = scalar_lea.vmem [#allocation0], 16
    %59 = vst [vmem:[%s58] sm:%s3] %v57
    %s60 = scalar_lea.vmem %s0, 2
    %v61 = vld [vmem:[%s60] sm:%s3]
    %s62 = scalar_lea.vmem [#allocation0], 8
    %63 = vst [vmem:[%s62] sm:%s3] %v61
    %v64 = vld [vmem:[%s0] sm:%s3]
    %65 = vst [vmem:[#allocation0] sm:%s3] %v64
    %v66 = vld [vmem:[#allocation0] ss:$8 sm:$0xf]
    %v67 = vld [vmem:[#allocation0] ss:$8 sm:$0xf0]
    %vm68 = vcmask 1047556
    %v69 = vsel %vm68, %v67, %v66
    %vm70 = vcmask 261120
    %71 = vst.msk [vmem:[%s1] sm:$0xff] %vm70, %v69
    %s72 = scalar_lea.vmem [#allocation0], 64
    %v73 = vld [vmem:[%s72] ss:$8 sm:$0xf]
    %s74 = scalar_lea.vmem [#allocation0], 64
    %v75 = vld [vmem:[%s74] ss:$8 sm:$0xf0]
    %vm76 = vcmask 1047556
    %v77 = vsel %vm76, %v75, %v73
    %vm78 = vcmask 261120
    %s79 = scalar_lea.vmem %s1, 8
    %80 = vst.msk [vmem:[%s79] sm:$0xff] %vm78, %v77
    %s81 = scalar_lea.vmem [#allocation0], 1
    %v82 = vld [vmem:[%s81] ss:$8 sm:$0xf]
    %s83 = scalar_lea.vmem [#allocation0], 1
    %v84 = vld [vmem:[%s83] ss:$8 sm:$0xf0]
    %vm85 = vcmask 1047556
    %v86 = vsel %vm85, %v84, %v82
    %87 = vrot.lane.b32.xlu0 %v86, 32
    %v88 = vpop.permute.xlu0 %87
    %vm89 = vcmask 523520
    %90 = vst.msk [vmem:[%s1] sm:$0xff] %vm89, %v88
    %s91 = scalar_lea.vmem [#allocation0], 65
    %v92 = vld [vmem:[%s91] ss:$8 sm:$0xf]
    %s93 = scalar_lea.vmem [#allocation0], 65
    %v94 = vld [vmem:[%s93] ss:$8 sm:$0xf0]
    %vm95 = vcmask 1047556
    %v96 = vsel %vm95, %v94, %v92
    %97 = vrot.lane.b32.xlu0 %v96, 32
    %v98 = vpop.permute.xlu0 %97
    %vm99 = vcmask 523520
    %s100 = scalar_lea.vmem %s1, 8
    %101 = vst.msk [vmem:[%s100] sm:$0xff] %vm99, %v98

// kernel: starcoder2_decoder_layer.1
$region0: #{starcoder2_decoder_layer.1}
  #allocation0 [shape = 'u32[]', space=smem, size = 0x4, offset = 0x4, fixed_abs, tag = 'smem constant byte address 0x4 - core index']
  #allocation1 [shape = 'u32[72,128]{1,0:T(1,128)}', space=vmem, size = 0x9000, scoped, tag = 'internal scratch']
  %s0 = inlined_call_operand.hbm [shape: f32[16,128], index: 0, kind: input, shape index: {}, may-alias: {0,17}]
  %s1 = inlined_call_operand.vmem [shape: f32[16,128], index: 1, kind: input, shape index: {}]
  %s2 = inlined_call_operand.vmem [shape: f32[16,128], index: 2, kind: input, shape index: {}]
  %s3 = inlined_call_operand.vmem [shape: f32[16,64], index: 3, kind: input, shape index: {}]
  %s4 = inlined_call_operand.vmem [shape: f32[16,64], index: 4, kind: input, shape index: {}]
  %s5 = inlined_call_operand.vmem [shape: f32[1,128], index: 5, kind: input, shape index: {}]
  %s6 = inlined_call_operand.vmem [shape: f32[1,128], index: 6, kind: input, shape index: {}]
  %s7 = inlined_call_operand.vmem [shape: bf16[128,448], index: 7, kind: input, shape index: {}]
  %s8 = inlined_call_operand.vmem [shape: f32[1,448], index: 8, kind: input, shape index: {}]
  %s9 = inlined_call_operand.vmem [shape: bf16[128,128], index: 9, kind: input, shape index: {}]
  %s10 = inlined_call_operand.vmem [shape: f32[1,128], index: 10, kind: input, shape index: {}]
  %s11 = inlined_call_operand.vmem [shape: f32[1,128], index: 11, kind: input, shape index: {}]
  %s12 = inlined_call_operand.vmem [shape: f32[1,128], index: 12, kind: input, shape index: {}]
  %s13 = inlined_call_operand.vmem [shape: bf16[128,256], index: 13, kind: input, shape index: {}]
  %s14 = inlined_call_operand.vmem [shape: f32[1,256], index: 14, kind: input, shape index: {}]
  %s15 = inlined_call_operand.vmem [shape: bf16[256,128], index: 15, kind: input, shape index: {}]
  %s16 = inlined_call_operand.vmem [shape: f32[1,128], index: 16, kind: input, shape index: {}]
  %s17 = inlined_call_operand.hbm [shape: f32[16,128], index: 17, kind: output, shape index: {}, may-alias: {0,17}]
  %s18 = sld [smem:[#allocation0]]
  $region82: #{starcoder2_decoder_layer.1} parent=0
    _
  %s20 = ssub.s32 1, %s18
  %s21 = scalar_select 0, %s20, %s18
  $region1: #{starcoder2_decoder_layer.1} parent=0
    #allocation2 [shape = 'u8[8192]{0}', space=vmem, size = 0x2000, scoped, tag = 'input window, operand 0, single buffered']
    #allocation3 [shape = 's32[1]{0}', space=sflag, size = 0x4, scoped, tag = 'scoped memory for starcoder2_decoder_layer.1']
    #allocation4 [shape = 's32[1]{0}', space=sflag, size = 0x4, scoped, tag = 'scoped memory for starcoder2_decoder_layer.1']
    #allocation5 [shape = 'u8[8192]{0}', space=vmem, size = 0x2000, scoped, tag = 'output window, operand 0, single buffered']
    %22 = vsyncpa [#allocation3], 0
    %23 = vsyncpa [#allocation4], 0
    // Predicated region
    $region2: #{starcoder2_decoder_layer.1} parent=1 // pred_check
      _
    $region3: #{starcoder2_decoder_layer.1} parent=1 // pred_check_branch
      %25 = sbr.rel (0) target = $region5
    $region4: #{starcoder2_decoder_layer.1} parent=1 // pred_region
      %27 = vsyncadd [#allocation3], 0
      %s28 = sshll.u32 %s0, 4
      %s29 = int_to_ptr.hbm [resolvable:$true] %s28
      %s30 = sshll.u32 [#allocation2], 4
      %s31 = int_to_ptr.vmem [resolvable:$true] %s30
      %36 = dma.hbm_to_vmem [thread:$0]  %s29, 256, %s31, [#allocation3], 128, 128, 8
    $region5: #{starcoder2_decoder_layer.1} parent=1 // pred_fallthru
      _
    // Predicated region
    $region6: #{starcoder2_decoder_layer.1} parent=1 // pred_check
      _
    $region7: #{starcoder2_decoder_layer.1} parent=1 // pred_check_branch
      %38 = sbr.rel (0) target = $region9
    $region8: #{starcoder2_decoder_layer.1} parent=1 // pred_region
      _
    $region9: #{starcoder2_decoder_layer.1} parent=1 // pred_fallthru
      _
    // Predicated region
    $region10: #{starcoder2_decoder_layer.1} parent=1 // pred_check
      _
    $region11: #{starcoder2_decoder_layer.1} parent=1 // pred_check_branch
      %40 = sbr.rel (0) target = $region13
    $region12: #{starcoder2_decoder_layer.1} parent=1 // pred_region
      _
    $region13: #{starcoder2_decoder_layer.1} parent=1 // pred_fallthru
      _
    // Predicated region
    $region14: #{starcoder2_decoder_layer.1} parent=1 // pred_check
      _
    $region15: #{starcoder2_decoder_layer.1} parent=1 // pred_check_branch
      %42 = sbr.rel (0) target = $region17
    $region16: #{starcoder2_decoder_layer.1} parent=1 // pred_region
      _
    $region17: #{starcoder2_decoder_layer.1} parent=1 // pred_fallthru
      _
    // Predicated region
    $region18: #{starcoder2_decoder_layer.1} parent=1 // pred_check
      _
    $region19: #{starcoder2_decoder_layer.1} parent=1 // pred_check_branch
      %44 = sbr.rel (0) target = $region21
    $region20: #{starcoder2_decoder_layer.1} parent=1 // pred_region
      _
    $region21: #{starcoder2_decoder_layer.1} parent=1 // pred_fallthru
      _
    // Predicated region
    $region22: #{starcoder2_decoder_layer.1} parent=1 // pred_check
      _
    $region23: #{starcoder2_decoder_layer.1} parent=1 // pred_check_branch
      %46 = sbr.rel (0) target = $region25
    $region24: #{starcoder2_decoder_layer.1} parent=1 // pred_region
      _
    $region25: #{starcoder2_decoder_layer.1} parent=1 // pred_fallthru
      _
    // Predicated region
    $region26: #{starcoder2_decoder_layer.1} parent=1 // pred_check
      _
    $region27: #{starcoder2_decoder_layer.1} parent=1 // pred_check_branch
      %48 = sbr.rel (0) target = $region29
    $region28: #{starcoder2_decoder_layer.1} parent=1 // pred_region
      _
    $region29: #{starcoder2_decoder_layer.1} parent=1 // pred_fallthru
      _
    // Predicated region
    $region30: #{starcoder2_decoder_layer.1} parent=1 // pred_check
      _
    $region31: #{starcoder2_decoder_layer.1} parent=1 // pred_check_branch
      %50 = sbr.rel (0) target = $region33
    $region32: #{starcoder2_decoder_layer.1} parent=1 // pred_region
      _
    $region33: #{starcoder2_decoder_layer.1} parent=1 // pred_fallthru
      _
    // Predicated region
    $region34: #{starcoder2_decoder_layer.1} parent=1 // pred_check
      _
    $region35: #{starcoder2_decoder_layer.1} parent=1 // pred_check_branch
      %52 = sbr.rel (0) target = $region37
    $region36: #{starcoder2_decoder_layer.1} parent=1 // pred_region
      _
    $region37: #{starcoder2_decoder_layer.1} parent=1 // pred_fallthru
      _
    // Predicated region
    $region38: #{starcoder2_decoder_layer.1} parent=1 // pred_check
      _
    $region39: #{starcoder2_decoder_layer.1} parent=1 // pred_check_branch
      %54 = sbr.rel (0) target = $region41
    $region40: #{starcoder2_decoder_layer.1} parent=1 // pred_region
      _
    $region41: #{starcoder2_decoder_layer.1} parent=1 // pred_fallthru
      _
    // Predicated region
    $region42: #{starcoder2_decoder_layer.1} parent=1 // pred_check
      _
    $region43: #{starcoder2_decoder_layer.1} parent=1 // pred_check_branch
      %56 = sbr.rel (0) target = $region45
    $region44: #{starcoder2_decoder_layer.1} parent=1 // pred_region
      _
    $region45: #{starcoder2_decoder_layer.1} parent=1 // pred_fallthru
      _
    // Predicated region
    $region46: #{starcoder2_decoder_layer.1} parent=1 // pred_check
      _
    $region47: #{starcoder2_decoder_layer.1} parent=1 // pred_check_branch
      %58 = sbr.rel (0) target = $region49
    $region48: #{starcoder2_decoder_layer.1} parent=1 // pred_region
      _
    $region49: #{starcoder2_decoder_layer.1} parent=1 // pred_fallthru
      _
    // Predicated region
    $region50: #{starcoder2_decoder_layer.1} parent=1 // pred_check
      _
    $region51: #{starcoder2_decoder_layer.1} parent=1 // pred_check_branch
      %60 = sbr.rel (0) target = $region53
    $region52: #{starcoder2_decoder_layer.1} parent=1 // pred_region
      _
    $region53: #{starcoder2_decoder_layer.1} parent=1 // pred_fallthru
      _
    // Predicated region
    $region54: #{starcoder2_decoder_layer.1} parent=1 // pred_check
      _
    $region55: #{starcoder2_decoder_layer.1} parent=1 // pred_check_branch
      %62 = sbr.rel (0) target = $region57
    $region56: #{starcoder2_decoder_layer.1} parent=1 // pred_region
      _
    $region57: #{starcoder2_decoder_layer.1} parent=1 // pred_fallthru
      _
    // Predicated region
    $region58: #{starcoder2_decoder_layer.1} parent=1 // pred_check
      _
    $region59: #{starcoder2_decoder_layer.1} parent=1 // pred_check_branch
      %64 = sbr.rel (0) target = $region61
    $region60: #{starcoder2_decoder_layer.1} parent=1 // pred_region
      _
    $region61: #{starcoder2_decoder_layer.1} parent=1 // pred_fallthru
      _
    // Predicated region
    $region62: #{starcoder2_decoder_layer.1} parent=1 // pred_check
      _
    $region63: #{starcoder2_decoder_layer.1} parent=1 // pred_check_branch
      %66 = sbr.rel (0) target = $region65
    $region64: #{starcoder2_decoder_layer.1} parent=1 // pred_region
      _
    $region65: #{starcoder2_decoder_layer.1} parent=1 // pred_fallthru
      _
    // Predicated region
    $region66: #{starcoder2_decoder_layer.1} parent=1 // pred_check
      _
    $region67: #{starcoder2_decoder_layer.1} parent=1 // pred_check_branch
      %68 = sbr.rel (0) target = $region69
    $region68: #{starcoder2_decoder_layer.1} parent=1 // pred_region
      _
    $region69: #{starcoder2_decoder_layer.1} parent=1 // pred_fallthru
      _
    // Predicated region
    $region70: #{starcoder2_decoder_layer.1} parent=1 // pred_check
      _
    $region71: #{starcoder2_decoder_layer.1} parent=1 // pred_check_branch
      %70 = sbr.rel (0) target = $region73
    $region72: #{starcoder2_decoder_layer.1} parent=1 // pred_region
      %72 = dma.done [#allocation3], 256
    $region73: #{starcoder2_decoder_layer.1} parent=1 // pred_fallthru
      _
    %v74 = vld [vmem:[#allocation2] sm:$0xff]
    %v75 = vld [vmem:[#allocation2 + $0x8] sm:$0xff]
    %v76 = vld [vmem:[%s5] sm:$0x1]
    %v77 = vld [vmem:[%s6] sm:$0x1]
    %78 = vadd.xlane.f32.xlu0 %v74
    %v79 = vpop.xlane.xlu0 %78
    %80 = vadd.xlane.f32.xlu0 %v75
    %v81 = vpop.xlane.xlu0 %80
    %v82 = vrcp.pop 128.0
    %v83 = vmul.f32 128.0, %v82
    %v84 = vsub.f32 1.0, %v83
    %v85 = vmul.f32 %v82, %v84
    %v86 = vadd.f32 %v82, %v85
    %vm87 = vweird.f32 %v82
    %v88 = vsel %vm87, %v82, %v86
    %v89 = vmul.f32 %v79, %v88
    %v90 = vmul.f32 %v81, %v88
    %v91 = vsub.f32 %v74, %v89
    %v92 = vsub.f32 %v75, %v90
    %v93 = vmul.f32 %v91, %v91
    %v94 = vmul.f32 %v92, %v92
    %95 = vadd.xlane.f32.xlu0 %v93
    %v96 = vpop.xlane.xlu0 %95
    %97 = vadd.xlane.f32.xlu0 %v94
    %v98 = vpop.xlane.xlu0 %97
    %v99 = vmul.f32 %v96, %v88
    %v100 = vmul.f32 %v98, %v88
    %v101 = vadd.f32 %v99, 1e-05
    %v102 = vadd.f32 %v100, 1e-05
    %v103 = vrsqrt.pop %v101
    %v104 = vmul.f32 %v103, %v101
    %v105 = vmul.f32 %v104, %v103
    %v106 = vmul.f32 0.5, %v105
    %v107 = vsub.f32 1.5, %v106
    %v108 = vmul.f32 %v103, %v107
    %vm109 = vweird.f32 %v101
    %vm110 = vweird.f32 %v103
    %vm111 = vmor %vm109, %vm110
    %v112 = vsel %vm111, %v103, %v108
    %v113 = vrsqrt.pop %v102
    %v114 = vmul.f32 %v113, %v102
    %v115 = vmul.f32 %v114, %v113
    %v116 = vmul.f32 0.5, %v115
    %v117 = vsub.f32 1.5, %v116
    %v118 = vmul.f32 %v113, %v117
    %vm119 = vweird.f32 %v102
    %vm120 = vweird.f32 %v113
    %vm121 = vmor %vm119, %vm120
    %v122 = vsel %vm121, %v113, %v118
    %v123 = vmul.f32 %v91, %v112
    %v124 = vmul.f32 %v92, %v122
    %v126 = vperm.slane %v76, 0
    %v128 = vmul.f32 %v123, %v126
    %v129 = vmul.f32 %v124, %v126
    %v131 = vperm.slane %v77, 0
    %v133 = vadd.f32 %v128, %v131
    %v134 = vadd.f32 %v129, %v131
    %v135 = vpack.c.bf16 %v134, %v133
    %v136 = vld [vmem:[%s7] sm:$0xff]
    %v137 = vld [vmem:[%s7 + $0x8] sm:$0xff]
    %v138 = vld [vmem:[%s7 + $0x10] sm:$0xff]
    %v139 = vld [vmem:[%s7 + $0x18] sm:$0xff]
    %v140 = vld [vmem:[%s7 + $0x20] sm:$0xff]
    %v141 = vld [vmem:[%s7 + $0x28] sm:$0xff]
    %v142 = vld [vmem:[%s7 + $0x30] sm:$0xff]
    %v143 = vld [vmem:[%s7 + $0x38] sm:$0xff]
    %v144 = vld [vmem:[%s7 + $0x40] sm:$0xff]
    %v145 = vld [vmem:[%s7 + $0x48] sm:$0xff]
    %v146 = vld [vmem:[%s7 + $0x50] sm:$0xff]
    %v147 = vld [vmem:[%s7 + $0x58] sm:$0xff]
    %v148 = vld [vmem:[%s7 + $0x60] sm:$0xff]
    %v149 = vld [vmem:[%s7 + $0x68] sm:$0xff]
    %v150 = vld [vmem:[%s7 + $0x70] sm:$0xff]
    %v151 = vld [vmem:[%s7 + $0x78] sm:$0xff]
    %v152 = vld [vmem:[%s7 + $0x80] sm:$0xff]
    %v153 = vld [vmem:[%s7 + $0x88] sm:$0xff]
    %v154 = vld [vmem:[%s7 + $0x90] sm:$0xff]
    %v155 = vld [vmem:[%s7 + $0x98] sm:$0xff]
    %v156 = vld [vmem:[%s7 + $0xa0] sm:$0xff]
    %v157 = vld [vmem:[%s7 + $0xa8] sm:$0xff]
    %v158 = vld [vmem:[%s7 + $0xb0] sm:$0xff]
    %v159 = vld [vmem:[%s7 + $0xb8] sm:$0xff]
    %v160 = vld [vmem:[%s7 + $0xc0] sm:$0xff]
    %v161 = vld [vmem:[%s7 + $0xc8] sm:$0xff]
    %v162 = vld [vmem:[%s7 + $0xd0] sm:$0xff]
    %v163 = vld [vmem:[%s7 + $0xd8] sm:$0xff]
    %v164 = vld [vmem:[%s7 + $0xe0] sm:$0xff]
    %v165 = vld [vmem:[%s7 + $0xe8] sm:$0xff]
    %v166 = vld [vmem:[%s7 + $0xf0] sm:$0xff]
    %v167 = vld [vmem:[%s7 + $0xf8] sm:$0xff]
    %v168 = vld [vmem:[%s8] sm:$0xf]
    %v170 = vperm.slane %v168, 0
    %v171 = vperm.slane %v168, 1
    %v172 = vperm.slane %v168, 2
    %v173 = vperm.slane %v168, 3
    %v210 = vunpack.c.l.b16 %v136
    %v211 = vunpack.c.h.b16 %v136
    %v212 = vunpack.c.l.b16 %v137
    %v213 = vunpack.c.h.b16 %v137
    %v214 = vunpack.c.l.b16 %v138
    %v215 = vunpack.c.h.b16 %v138
    %v216 = vunpack.c.l.b16 %v139
    %v217 = vunpack.c.h.b16 %v139
    %v218 = vunpack.c.l.b16 %v140
    %v219 = vunpack.c.h.b16 %v140
    %v220 = vunpack.c.l.b16 %v141
    %v221 = vunpack.c.h.b16 %v141
    %v222 = vunpack.c.l.b16 %v142
    %v223 = vunpack.c.h.b16 %v142
    %v224 = vunpack.c.l.b16 %v143
    %v225 = vunpack.c.h.b16 %v143
    %v226 = vunpack.c.l.b16 %v144
    %v227 = vunpack.c.h.b16 %v144
    %v228 = vunpack.c.l.b16 %v145
    %v229 = vunpack.c.h.b16 %v145
    %v230 = vunpack.c.l.b16 %v146
    %v231 = vunpack.c.h.b16 %v146
    %v232 = vunpack.c.l.b16 %v147
    %v233 = vunpack.c.h.b16 %v147
    %v234 = vunpack.c.l.b16 %v148
    %v235 = vunpack.c.h.b16 %v148
    %v236 = vunpack.c.l.b16 %v149
    %v237 = vunpack.c.h.b16 %v149
    %v238 = vunpack.c.l.b16 %v150
    %v239 = vunpack.c.h.b16 %v150
    %v240 = vunpack.c.l.b16 %v151
    %v241 = vunpack.c.h.b16 %v151
    %v242 = vunpack.c.l.b16 %v152
    %v243 = vunpack.c.h.b16 %v152
    %v244 = vunpack.c.l.b16 %v153
    %v245 = vunpack.c.h.b16 %v153
    %v246 = vunpack.c.l.b16 %v154
    %v247 = vunpack.c.h.b16 %v154
    %v248 = vunpack.c.l.b16 %v155
    %v249 = vunpack.c.h.b16 %v155
    %v250 = vunpack.c.l.b16 %v156
    %v251 = vunpack.c.h.b16 %v156
    %v252 = vunpack.c.l.b16 %v157
    %v253 = vunpack.c.h.b16 %v157
    %v254 = vunpack.c.l.b16 %v158
    %v255 = vunpack.c.h.b16 %v158
    %v256 = vunpack.c.l.b16 %v159
    %v257 = vunpack.c.h.b16 %v159
    %v258 = vunpack.c.l.b16 %v160
    %v259 = vunpack.c.h.b16 %v160
    %v260 = vunpack.c.l.b16 %v161
    %v261 = vunpack.c.h.b16 %v161
    %v262 = vunpack.c.l.b16 %v162
    %v263 = vunpack.c.h.b16 %v162
    %v264 = vunpack.c.l.b16 %v163
    %v265 = vunpack.c.h.b16 %v163
    %v266 = vunpack.c.l.b16 %v164
    %v267 = vunpack.c.h.b16 %v164
    %v268 = vunpack.c.l.b16 %v165
    %v269 = vunpack.c.h.b16 %v165
    %v270 = vunpack.c.l.b16 %v166
    %v271 = vunpack.c.h.b16 %v166
    %v272 = vunpack.c.l.b16 %v167
    %v273 = vunpack.c.h.b16 %v167
    %v274 = vpack.c.b16 %v214, %v210
    %v275 = vpack.c.b16 %v215, %v211
    %v276 = vpack.c.b16 %v216, %v212
    %v277 = vpack.c.b16 %v217, %v213
    %v278 = vpack.c.b16 %v222, %v218
    %v279 = vpack.c.b16 %v223, %v219
    %v280 = vpack.c.b16 %v224, %v220
    %v281 = vpack.c.b16 %v225, %v221
    %v282 = vpack.c.b16 %v230, %v226
    %v283 = vpack.c.b16 %v231, %v227
    %v284 = vpack.c.b16 %v232, %v228
    %v285 = vpack.c.b16 %v233, %v229
    %v286 = vpack.c.b16 %v238, %v234
    %v287 = vpack.c.b16 %v239, %v235
    %v288 = vpack.c.b16 %v240, %v236
    %v289 = vpack.c.b16 %v241, %v237
    %v290 = vpack.c.b16 %v246, %v242
    %v291 = vpack.c.b16 %v247, %v243
    %v292 = vpack.c.b16 %v248, %v244
    %v293 = vpack.c.b16 %v249, %v245
    %v294 = vpack.c.b16 %v254, %v250
    %v295 = vpack.c.b16 %v255, %v251
    %v296 = vpack.c.b16 %v256, %v252
    %v297 = vpack.c.b16 %v257, %v253
    %v298 = vpack.c.b16 %v262, %v258
    %v299 = vpack.c.b16 %v263, %v259
    %v300 = vpack.c.b16 %v264, %v260
    %v301 = vpack.c.b16 %v265, %v261
    %v302 = vpack.c.b16 %v270, %v266
    %v303 = vpack.c.b16 %v271, %v267
    %v304 = vpack.c.b16 %v272, %v268
    %v305 = vpack.c.b16 %v273, %v269
    %338 = vmatpush.bf16.msra.mxu0 %v302
    %339 = vmatpush.bf16.msra.mxu0 %v298
    %340 = vmatpush.bf16.msra.mxu0 %v294
    %341 = vmatpush.bf16.msra.mxu0 %v290
    %342 = vmatpush.bf16.msra.mxu0 %v286
    %343 = vmatpush.bf16.msra.mxu0 %v282
    %344 = vmatpush.bf16.msra.mxu0 %v278
    %345 = vmatpush.bf16.msra.mxu0 %v274
    %346 = vmatmul.bf16.gmra.mxu0 %v135
    %v347 = vpop.f32.mrf.mxu0
    %v348 = vadd.f32 %v170, %v347
    %v349 = vpop.f32.mrf.mxu0
    %v350 = vadd.f32 %v170, %v349
    %351 = vdwg.mxu0
    %352 = vmatpush.bf16.msra.mxu0 %v303
    %353 = vmatpush.bf16.msra.mxu0 %v299
    %354 = vmatpush.bf16.msra.mxu0 %v295
    %355 = vmatpush.bf16.msra.mxu0 %v291
    %356 = vmatpush.bf16.msra.mxu0 %v287
    %357 = vmatpush.bf16.msra.mxu0 %v283
    %358 = vmatpush.bf16.msra.mxu0 %v279
    %359 = vmatpush.bf16.msra.mxu0 %v275
    %360 = vmatmul.bf16.gmra.mxu0 %v135
    %v361 = vpop.f32.mrf.mxu0
    %v362 = vadd.f32 %v171, %v361
    %v363 = vpop.f32.mrf.mxu0
    %v364 = vadd.f32 %v171, %v363
    %365 = vdwg.mxu0
    %366 = vmatpush.bf16.msra.mxu0 %v304
    %367 = vmatpush.bf16.msra.mxu0 %v300
    %368 = vmatpush.bf16.msra.mxu0 %v296
    %369 = vmatpush.bf16.msra.mxu0 %v292
    %370 = vmatpush.bf16.msra.mxu0 %v288
    %371 = vmatpush.bf16.msra.mxu0 %v284
    %372 = vmatpush.bf16.msra.mxu0 %v280
    %373 = vmatpush.bf16.msra.mxu0 %v276
    %374 = vmatmul.bf16.gmra.mxu0 %v135
    %v375 = vpop.f32.mrf.mxu0
    %v376 = vadd.f32 %v172, %v375
    %v377 = vpop.f32.mrf.mxu0
    %v378 = vadd.f32 %v172, %v377
    %379 = vdwg.mxu0
    %380 = vmatpush.bf16.msra.mxu0 %v305
    %381 = vmatpush.bf16.msra.mxu0 %v301
    %382 = vmatpush.bf16.msra.mxu0 %v297
    %383 = vmatpush.bf16.msra.mxu0 %v293
    %384 = vmatpush.bf16.msra.mxu0 %v289
    %385 = vmatpush.bf16.msra.mxu0 %v285
    %386 = vmatpush.bf16.msra.mxu0 %v281
    %387 = vmatpush.bf16.msra.mxu0 %v277
    %388 = vmatmul.bf16.gmra.mxu0 %v135
    %v389 = vpop.f32.mrf.mxu0
    %v390 = vadd.f32 %v173, %v389
    %v391 = vpop.f32.mrf.mxu0
    %v392 = vadd.f32 %v173, %v391
    %393 = vdwg.mxu0
    %v394 = vld [vmem:[%s1] sm:$0xff]
    %v395 = vld [vmem:[%s1 + $0x8] sm:$0xff]
    %v396 = vmul.f32 %v348, %v394
    %v397 = vmul.f32 %v350, %v395
    %v398 = vld [vmem:[%s2] sm:$0xff]
    %v399 = vld [vmem:[%s2 + $0x8] sm:$0xff]
    %v400 = vmul.f32 %v376, %v398
    %v401 = vmul.f32 %v378, %v399
    %v402 = vadd.f32 %v396, %v400
    %v403 = vadd.f32 %v397, %v401
    %v404 = vpack.c.bf16 %v402, %v402
    %v405 = vpack.c.bf16 %v403, %v403
    %v406 = vld [vmem:[%s3] sm:$0xff]
    %v407 = vld [vmem:[%s3 + $0x8] sm:$0xff]
    %v408 = vmul.f32 %v362, %v406
    %v409 = vmul.f32 %v364, %v407
    %v410 = vld [vmem:[%s4] sm:$0xff]
    %v411 = vld [vmem:[%s4 + $0x8] sm:$0xff]
    %v412 = vmul.f32 %v390, %v410
    %v413 = vmul.f32 %v392, %v411
    %v414 = vadd.f32 %v408, %v412
    %v415 = vadd.f32 %v409, %v413
    %v416 = vpack.c.bf16 %v414, %v414
    %v417 = vpack.c.bf16 %v415, %v415
    %v418 = vpack.c.bf16 %v362, %v362
    %v419 = vpack.c.bf16 %v364, %v364
    %v420 = vlaneseq
    %v421 = vshrl.u32 %v420, 7
    %v422 = vadd.s32 %v421, 8
    %v423 = vlaneseq
    %v424 = vand.u32 %v423, 127
    %vm425 = vcmp.le.s32.totalorder %v424, %v421
    %vm426 = vcmp.le.s32.totalorder %v424, %v422
    %v429 = vunpack.c.l.b16 %v404
    %v430 = vunpack.c.l.b16 %v405
    %v431 = vpack.c.b16 %v430, %v429
    %v434 = vunpack.c.l.b16 %v416
    %v435 = vunpack.c.l.b16 %v417
    %v436 = vpack.c.b16 %v435, %v434
    %vm437 = vcmask 261120
    %v439 = vsel %vm437, %v431, 0
    %v442 = vsel %vm437, %v436, 0
    %444 = vmatpush.bf16.xpose.msra.mxu0 0
    %445 = vmatpush.bf16.xpose.msra.mxu0 0
    %446 = vmatpush.bf16.xpose.msra.mxu0 0
    %447 = vmatpush.bf16.xpose.msra.mxu0 0
    %448 = vmatpush.bf16.xpose.msra.mxu0 0
    %449 = vmatpush.bf16.xpose.msra.mxu0 0
    %450 = vmatpush.bf16.xpose.msra.mxu0 0
    %451 = vmatpush.bf16.xpose.msra.mxu0 %v442
    %452 = vmatmul.bf16.gmra.mxu0 %v439
    %v453 = vpop.f32.mrf.mxu0
    %v454 = vadd.f32 0.0, %v453
    %v455 = vpop.f32.mrf.mxu0
    %v456 = vadd.f32 0.0, %v455
    %457 = vdwg.mxu0
    %v458 = vsel %vm425, %v454, -1e+30
    %v459 = vsel %vm426, %v456, -1e+30
    %vm460 = vcmask 130048
    %v461 = vsel %vm460, %v458, -inf
    %462 = vmax.xlane.f32.xlu0 %v461
    %v463 = vpop.xlane.xlu0 %462
    %v464 = vsel %vm460, %v459, -inf
    %465 = vmax.xlane.f32.xlu0 %v464
    %v466 = vpop.xlane.xlu0 %465
    %v467 = vsub.f32 %v458, %v463
    %v468 = vsub.f32 %v459, %v466
    %v469 = vmul.f32 %v467, 1.442695
    %v470 = vpow.pop %v469
    %v471 = vmul.f32 %v468, 1.442695
    %v472 = vpow.pop %v471
    %v473 = vpack.c.bf16 %v472, %v470
    %v476 = vunpack.c.l.b16 %v418
    %v477 = vunpack.c.l.b16 %v419
    %v478 = vpack.c.b16 %v477, %v476
    %479 = vrot.lane.b32.xlu0 %v478, 64
    %v480 = vpop.permute.xlu0 %479
    %v483 = vsel %vm460, %v473, 0
    %485 = vmatpush.bf16.msra.mxu0 0
    %486 = vmatpush.bf16.msra.mxu0 0
    %487 = vmatpush.bf16.msra.mxu0 0
    %488 = vmatpush.bf16.msra.mxu0 0
    %489 = vmatpush.bf16.msra.mxu0 0
    %490 = vmatpush.bf16.msra.mxu0 0
    %491 = vmatpush.bf16.msra.mxu0 0
    %492 = vmatpush.bf16.msra.mxu0 %v480
    %493 = vmatmul.bf16.gmra.mxu0 %v483
    %v494 = vpop.f32.mrf.mxu0
    %v495 = vadd.f32 0.0, %v494
    %v496 = vpop.f32.mrf.mxu0
    %v497 = vadd.f32 0.0, %v496
    %498 = vdwg.mxu0
    %v499 = vsel %vm460, %v470, 0.0
    %500 = vadd.xlane.f32.xlu0 %v499
    %v501 = vpop.xlane.xlu0 %500
    %v502 = vsel %vm460, %v472, 0.0
    %503 = vadd.xlane.f32.xlu0 %v502
    %v504 = vpop.xlane.xlu0 %503
    %v505 = vrcp.pop %v501
    %v506 = vrcp.pop %v504
    %v507 = vmul.f32 %v495, %v505
    %v508 = vmul.f32 %v497, %v506
    %v509 = vpack.c.bf16 %v507, %v507
    %v510 = vpack.c.bf16 %v508, %v508
    %511 = vrot.lane.b32.xlu0 %v431, 96
    %v512 = vpop.permute.xlu0 %511
    %v514 = vsel %vm437, %v512, 0
    %516 = vmatpush.bf16.xpose.msra.mxu0 0
    %517 = vmatpush.bf16.xpose.msra.mxu0 0
    %518 = vmatpush.bf16.xpose.msra.mxu0 0
    %519 = vmatpush.bf16.xpose.msra.mxu0 0
    %520 = vmatpush.bf16.xpose.msra.mxu0 0
    %521 = vmatpush.bf16.xpose.msra.mxu0 0
    %522 = vmatpush.bf16.xpose.msra.mxu0 0
    %523 = vmatpush.bf16.xpose.msra.mxu0 %v442
    %524 = vmatmul.bf16.gmra.mxu0 %v514
    %v525 = vpop.f32.mrf.mxu0
    %v526 = vadd.f32 0.0, %v525
    %v527 = vpop.f32.mrf.mxu0
    %v528 = vadd.f32 0.0, %v527
    %529 = vdwg.mxu0
    %v530 = vsel %vm425, %v526, -1e+30
    %v531 = vsel %vm426, %v528, -1e+30
    %v532 = vsel %vm460, %v530, -inf
    %533 = vmax.xlane.f32.xlu0 %v532
    %v534 = vpop.xlane.xlu0 %533
    %v535 = vsel %vm460, %v531, -inf
    %536 = vmax.xlane.f32.xlu0 %v535
    %v537 = vpop.xlane.xlu0 %536
    %v538 = vsub.f32 %v530, %v534
    %v539 = vsub.f32 %v531, %v537
    %v540 = vmul.f32 %v538, 1.442695
    %v541 = vpow.pop %v540
    %v542 = vmul.f32 %v539, 1.442695
    %v543 = vpow.pop %v542
    %v544 = vpack.c.bf16 %v543, %v541
    %v546 = vsel %vm460, %v544, 0
    %548 = vmatpush.bf16.msra.mxu0 0
    %549 = vmatpush.bf16.msra.mxu0 0
    %550 = vmatpush.bf16.msra.mxu0 0
    %551 = vmatpush.bf16.msra.mxu0 0
    %552 = vmatpush.bf16.msra.mxu0 0
    %553 = vmatpush.bf16.msra.mxu0 0
    %554 = vmatpush.bf16.msra.mxu0 0
    %555 = vmatpush.bf16.msra.mxu0 %v480
    %556 = vmatmul.bf16.gmra.mxu0 %v546
    %v557 = vpop.f32.mrf.mxu0
    %v558 = vadd.f32 0.0, %v557
    %v559 = vpop.f32.mrf.mxu0
    %v560 = vadd.f32 0.0, %v559
    %561 = vdwg.mxu0
    %v562 = vsel %vm460, %v541, 0.0
    %563 = vadd.xlane.f32.xlu0 %v562
    %v564 = vpop.xlane.xlu0 %563
    %v565 = vsel %vm460, %v543, 0.0
    %566 = vadd.xlane.f32.xlu0 %v565
    %v567 = vpop.xlane.xlu0 %566
    %v568 = vrcp.pop %v564
    %v569 = vrcp.pop %v567
    %v570 = vmul.f32 %v558, %v568
    %v571 = vmul.f32 %v560, %v569
    %v572 = vpack.c.bf16 %v570, %v570
    %v573 = vpack.c.bf16 %v571, %v571
    %574 = vrot.lane.b32.xlu0 %v431, 64
    %v575 = vpop.permute.xlu0 %574
    %576 = vrot.lane.b32.xlu0 %v436, 96
    %v577 = vpop.permute.xlu0 %576
    %v579 = vsel %vm437, %v575, 0
    %v582 = vsel %vm437, %v577, 0
    %584 = vmatpush.bf16.xpose.msra.mxu0 0
    %585 = vmatpush.bf16.xpose.msra.mxu0 0
    %586 = vmatpush.bf16.xpose.msra.mxu0 0
    %587 = vmatpush.bf16.xpose.msra.mxu0 0
    %588 = vmatpush.bf16.xpose.msra.mxu0 0
    %589 = vmatpush.bf16.xpose.msra.mxu0 0
    %590 = vmatpush.bf16.xpose.msra.mxu0 0
    %591 = vmatpush.bf16.xpose.msra.mxu0 %v582
    %592 = vmatmul.bf16.gmra.mxu0 %v579
    %v593 = vpop.f32.mrf.mxu0
    %v594 = vadd.f32 0.0, %v593
    %v595 = vpop.f32.mrf.mxu0
    %v596 = vadd.f32 0.0, %v595
    %597 = vdwg.mxu0
    %v598 = vsel %vm425, %v594, -1e+30
    %v599 = vsel %vm426, %v596, -1e+30
    %v600 = vsel %vm460, %v598, -inf
    %601 = vmax.xlane.f32.xlu0 %v600
    %v602 = vpop.xlane.xlu0 %601
    %v603 = vsel %vm460, %v599, -inf
    %604 = vmax.xlane.f32.xlu0 %v603
    %v605 = vpop.xlane.xlu0 %604
    %v606 = vsub.f32 %v598, %v602
    %v607 = vsub.f32 %v599, %v605
    %v608 = vmul.f32 %v606, 1.442695
    %v609 = vpow.pop %v608
    %v610 = vmul.f32 %v607, 1.442695
    %v611 = vpow.pop %v610
    %v612 = vpack.c.bf16 %v611, %v609
    %613 = vrot.lane.b32.xlu0 %v478, 32
    %v614 = vpop.permute.xlu0 %613
    %v617 = vsel %vm460, %v612, 0
    %619 = vmatpush.bf16.msra.mxu0 0
    %620 = vmatpush.bf16.msra.mxu0 0
    %621 = vmatpush.bf16.msra.mxu0 0
    %622 = vmatpush.bf16.msra.mxu0 0
    %623 = vmatpush.bf16.msra.mxu0 0
    %624 = vmatpush.bf16.msra.mxu0 0
    %625 = vmatpush.bf16.msra.mxu0 0
    %626 = vmatpush.bf16.msra.mxu0 %v614
    %627 = vmatmul.bf16.gmra.mxu0 %v617
    %v628 = vpop.f32.mrf.mxu0
    %v629 = vadd.f32 0.0, %v628
    %v630 = vpop.f32.mrf.mxu0
    %v631 = vadd.f32 0.0, %v630
    %632 = vdwg.mxu0
    %v633 = vsel %vm460, %v609, 0.0
    %634 = vadd.xlane.f32.xlu0 %v633
    %v635 = vpop.xlane.xlu0 %634
    %v636 = vsel %vm460, %v611, 0.0
    %637 = vadd.xlane.f32.xlu0 %v636
    %v638 = vpop.xlane.xlu0 %637
    %v639 = vrcp.pop %v635
    %v640 = vrcp.pop %v638
    %v641 = vmul.f32 %v629, %v639
    %v642 = vmul.f32 %v631, %v640
    %v643 = vpack.c.bf16 %v641, %v641
    %v644 = vpack.c.bf16 %v642, %v642
    %645 = vrot.lane.b32.xlu0 %v431, 32
    %v646 = vpop.permute.xlu0 %645
    %v648 = vsel %vm437, %v646, 0
    %650 = vmatpush.bf16.xpose.msra.mxu0 0
    %651 = vmatpush.bf16.xpose.msra.mxu0 0
    %652 = vmatpush.bf16.xpose.msra.mxu0 0
    %653 = vmatpush.bf16.xpose.msra.mxu0 0
    %654 = vmatpush.bf16.xpose.msra.mxu0 0
    %655 = vmatpush.bf16.xpose.msra.mxu0 0
    %656 = vmatpush.bf16.xpose.msra.mxu0 0
    %657 = vmatpush.bf16.xpose.msra.mxu0 %v582
    %658 = vmatmul.bf16.gmra.mxu0 %v648
    %v659 = vpop.f32.mrf.mxu0
    %v660 = vadd.f32 0.0, %v659
    %v661 = vpop.f32.mrf.mxu0
    %v662 = vadd.f32 0.0, %v661
    %663 = vdwg.mxu0
    %v664 = vsel %vm425, %v660, -1e+30
    %v665 = vsel %vm426, %v662, -1e+30
    %v666 = vsel %vm460, %v664, -inf
    %667 = vmax.xlane.f32.xlu0 %v666
    %v668 = vpop.xlane.xlu0 %667
    %v669 = vsel %vm460, %v665, -inf
    %670 = vmax.xlane.f32.xlu0 %v669
    %v671 = vpop.xlane.xlu0 %670
    %v672 = vsub.f32 %v664, %v668
    %v673 = vsub.f32 %v665, %v671
    %v674 = vmul.f32 %v672, 1.442695
    %v675 = vpow.pop %v674
    %v676 = vmul.f32 %v673, 1.442695
    %v677 = vpow.pop %v676
    %v678 = vpack.c.bf16 %v677, %v675
    %v680 = vsel %vm460, %v678, 0
    %682 = vmatpush.bf16.msra.mxu0 0
    %683 = vmatpush.bf16.msra.mxu0 0
    %684 = vmatpush.bf16.msra.mxu0 0
    %685 = vmatpush.bf16.msra.mxu0 0
    %686 = vmatpush.bf16.msra.mxu0 0
    %687 = vmatpush.bf16.msra.mxu0 0
    %688 = vmatpush.bf16.msra.mxu0 0
    %689 = vmatpush.bf16.msra.mxu0 %v614
    %690 = vmatmul.bf16.gmra.mxu0 %v680
    %v691 = vpop.f32.mrf.mxu0
    %v692 = vadd.f32 0.0, %v691
    %v693 = vpop.f32.mrf.mxu0
    %v694 = vadd.f32 0.0, %v693
    %695 = vdwg.mxu0
    %v696 = vsel %vm460, %v675, 0.0
    %697 = vadd.xlane.f32.xlu0 %v696
    %v698 = vpop.xlane.xlu0 %697
    %v699 = vsel %vm460, %v677, 0.0
    %700 = vadd.xlane.f32.xlu0 %v699
    %v701 = vpop.xlane.xlu0 %700
    %v702 = vrcp.pop %v698
    %v703 = vrcp.pop %v701
    %v704 = vmul.f32 %v692, %v702
    %v705 = vmul.f32 %v694, %v703
    %v706 = vpack.c.bf16 %v704, %v704
    %v707 = vpack.c.bf16 %v705, %v705
    %v710 = vunpack.c.l.b16 %v509
    %v711 = vunpack.c.l.b16 %v510
    %v712 = vpack.c.b16 %v711, %v710
    %v715 = vunpack.c.l.b16 %v572
    %v716 = vunpack.c.l.b16 %v573
    %v717 = vpack.c.b16 %v716, %v715
    %718 = vrot.lane.b32.xlu0 %v717, 32
    %v719 = vpop.permute.xlu0 %718
    %v722 = vunpack.c.l.b16 %v643
    %v723 = vunpack.c.l.b16 %v644
    %v724 = vpack.c.b16 %v723, %v722
    %725 = vrot.lane.b32.xlu0 %v724, 64
    %v726 = vpop.permute.xlu0 %725
    %v729 = vunpack.c.l.b16 %v706
    %v730 = vunpack.c.l.b16 %v707
    %v731 = vpack.c.b16 %v730, %v729
    %732 = vrot.lane.b32.xlu0 %v731, 96
    %v733 = vpop.permute.xlu0 %732
    %v736 = vsel %vm437, %v712, %v719
    %vm737 = vcmask 523264
    %v739 = vsel %vm737, %v736, %v726
    %vm740 = vcmask 785408
    %v742 = vsel %vm740, %v739, %v733
    %v744 = vld [vmem:[%s9] sm:$0xf]
    %v745 = vld [vmem:[%s9 + $0x4] sm:$0xf]
    %v746 = vld [vmem:[%s9 + $0x8] sm:$0xf]
    %v747 = vld [vmem:[%s9 + $0xc] sm:$0xf]
    %v748 = vld [vmem:[%s9 + $0x10] sm:$0xf]
    %v749 = vld [vmem:[%s9 + $0x14] sm:$0xf]
    %v750 = vld [vmem:[%s9 + $0x18] sm:$0xf]
    %v751 = vld [vmem:[%s9 + $0x1c] sm:$0xf]
    %v752 = vld [vmem:[%s9 + $0x20] sm:$0xf]
    %v753 = vld [vmem:[%s9 + $0x24] sm:$0xf]
    %v754 = vld [vmem:[%s9 + $0x28] sm:$0xf]
    %v755 = vld [vmem:[%s9 + $0x2c] sm:$0xf]
    %v756 = vld [vmem:[%s9 + $0x30] sm:$0xf]
    %v757 = vld [vmem:[%s9 + $0x34] sm:$0xf]
    %v758 = vld [vmem:[%s9 + $0x38] sm:$0xf]
    %v759 = vld [vmem:[%s9 + $0x3c] sm:$0xf]
    %v760 = vld [vmem:[%s10] sm:$0x1]
    %v762 = vperm.slane %v760, 0
    %v780 = vunpack.c.l.b16 %v744
    %v781 = vunpack.c.l.b16 %v745
    %v782 = vunpack.c.l.b16 %v746
    %v783 = vunpack.c.l.b16 %v747
    %v784 = vunpack.c.l.b16 %v748
    %v785 = vunpack.c.l.b16 %v749
    %v786 = vunpack.c.l.b16 %v750
    %v787 = vunpack.c.l.b16 %v751
    %v788 = vunpack.c.l.b16 %v752
    %v789 = vunpack.c.l.b16 %v753
    %v790 = vunpack.c.l.b16 %v754
    %v791 = vunpack.c.l.b16 %v755
    %v792 = vunpack.c.l.b16 %v756
    %v793 = vunpack.c.l.b16 %v757
    %v794 = vunpack.c.l.b16 %v758
    %v795 = vunpack.c.l.b16 %v759
    %v796 = vpack.c.b16 %v781, %v780
    %v797 = vpack.c.b16 %v783, %v782
    %v798 = vpack.c.b16 %v785, %v784
    %v799 = vpack.c.b16 %v787, %v786
    %v800 = vpack.c.b16 %v789, %v788
    %v801 = vpack.c.b16 %v791, %v790
    %v802 = vpack.c.b16 %v793, %v792
    %v803 = vpack.c.b16 %v795, %v794
    %812 = vmatpush.bf16.msra.mxu0 %v803
    %813 = vmatpush.bf16.msra.mxu0 %v802
    %814 = vmatpush.bf16.msra.mxu0 %v801
    %815 = vmatpush.bf16.msra.mxu0 %v800
    %816 = vmatpush.bf16.msra.mxu0 %v799
    %817 = vmatpush.bf16.msra.mxu0 %v798
    %818 = vmatpush.bf16.msra.mxu0 %v797
    %819 = vmatpush.bf16.msra.mxu0 %v796
    %820 = vmatmul.bf16.gmra.mxu0 %v742
    %v821 = vpop.f32.mrf.mxu0
    %v822 = vadd.f32 %v762, %v821
    %v823 = vpop.f32.mrf.mxu0
    %v824 = vadd.f32 %v762, %v823
    %825 = vdwg.mxu0
    %v826 = vadd.f32 %v74, %v822
    %v827 = vadd.f32 %v75, %v824
    %v828 = vld [vmem:[%s11] sm:$0x1]
    %v829 = vld [vmem:[%s12] sm:$0x1]
    %830 = vadd.xlane.f32.xlu0 %v826
    %v831 = vpop.xlane.xlu0 %830
    %832 = vadd.xlane.f32.xlu0 %v827
    %v833 = vpop.xlane.xlu0 %832
    %v834 = vmul.f32 %v831, %v88
    %v835 = vmul.f32 %v833, %v88
    %v836 = vsub.f32 %v826, %v834
    %v837 = vsub.f32 %v827, %v835
    %v838 = vmul.f32 %v836, %v836
    %v839 = vmul.f32 %v837, %v837
    %840 = vadd.xlane.f32.xlu0 %v838
    %v841 = vpop.xlane.xlu0 %840
    %842 = vadd.xlane.f32.xlu0 %v839
    %v843 = vpop.xlane.xlu0 %842
    %v844 = vmul.f32 %v841, %v88
    %v845 = vmul.f32 %v843, %v88
    %v846 = vadd.f32 %v844, 1e-05
    %v847 = vadd.f32 %v845, 1e-05
    %v848 = vrsqrt.pop %v846
    %v849 = vmul.f32 %v848, %v846
    %v850 = vmul.f32 %v849, %v848
    %v851 = vmul.f32 0.5, %v850
    %v852 = vsub.f32 1.5, %v851
    %v853 = vmul.f32 %v848, %v852
    %vm854 = vweird.f32 %v846
    %vm855 = vweird.f32 %v848
    %vm856 = vmor %vm854, %vm855
    %v857 = vsel %vm856, %v848, %v853
    %v858 = vrsqrt.pop %v847
    %v859 = vmul.f32 %v858, %v847
    %v860 = vmul.f32 %v859, %v858
    %v861 = vmul.f32 0.5, %v860
    %v862 = vsub.f32 1.5, %v861
    %v863 = vmul.f32 %v858, %v862
    %vm864 = vweird.f32 %v847
    %vm865 = vweird.f32 %v858
    %vm866 = vmor %vm864, %vm865
    %v867 = vsel %vm866, %v858, %v863
    %v868 = vmul.f32 %v836, %v857
    %v869 = vmul.f32 %v837, %v867
    %v871 = vperm.slane %v828, 0
    %v873 = vmul.f32 %v868, %v871
    %v874 = vmul.f32 %v869, %v871
    %v876 = vperm.slane %v829, 0
    %v878 = vadd.f32 %v873, %v876
    %v879 = vadd.f32 %v874, %v876
    %v880 = vpack.c.bf16 %v879, %v878
    %v881 = vld [vmem:[%s13] sm:$0xff]
    %v882 = vld [vmem:[%s13 + $0x8] sm:$0xff]
    %v883 = vld [vmem:[%s13 + $0x10] sm:$0xff]
    %v884 = vld [vmem:[%s13 + $0x18] sm:$0xff]
    %v885 = vld [vmem:[%s13 + $0x20] sm:$0xff]
    %v886 = vld [vmem:[%s13 + $0x28] sm:$0xff]
    %v887 = vld [vmem:[%s13 + $0x30] sm:$0xff]
    %v888 = vld [vmem:[%s13 + $0x38] sm:$0xff]
    %v889 = vld [vmem:[%s13 + $0x40] sm:$0xff]
    %v890 = vld [vmem:[%s13 + $0x48] sm:$0xff]
    %v891 = vld [vmem:[%s13 + $0x50] sm:$0xff]
    %v892 = vld [vmem:[%s13 + $0x58] sm:$0xff]
    %v893 = vld [vmem:[%s13 + $0x60] sm:$0xff]
    %v894 = vld [vmem:[%s13 + $0x68] sm:$0xff]
    %v895 = vld [vmem:[%s13 + $0x70] sm:$0xff]
    %v896 = vld [vmem:[%s13 + $0x78] sm:$0xff]
    %v897 = vld [vmem:[%s14] sm:$0x3]
    %v899 = vperm.slane %v897, 0
    %v900 = vperm.slane %v897, 1
    %v919 = vunpack.c.l.b16 %v881
    %v920 = vunpack.c.h.b16 %v881
    %v921 = vunpack.c.l.b16 %v882
    %v922 = vunpack.c.h.b16 %v882
    %v923 = vunpack.c.l.b16 %v883
    %v924 = vunpack.c.h.b16 %v883
    %v925 = vunpack.c.l.b16 %v884
    %v926 = vunpack.c.h.b16 %v884
    %v927 = vunpack.c.l.b16 %v885
    %v928 = vunpack.c.h.b16 %v885
    %v929 = vunpack.c.l.b16 %v886
    %v930 = vunpack.c.h.b16 %v886
    %v931 = vunpack.c.l.b16 %v887
    %v932 = vunpack.c.h.b16 %v887
    %v933 = vunpack.c.l.b16 %v888
    %v934 = vunpack.c.h.b16 %v888
    %v935 = vunpack.c.l.b16 %v889
    %v936 = vunpack.c.h.b16 %v889
    %v937 = vunpack.c.l.b16 %v890
    %v938 = vunpack.c.h.b16 %v890
    %v939 = vunpack.c.l.b16 %v891
    %v940 = vunpack.c.h.b16 %v891
    %v941 = vunpack.c.l.b16 %v892
    %v942 = vunpack.c.h.b16 %v892
    %v943 = vunpack.c.l.b16 %v893
    %v944 = vunpack.c.h.b16 %v893
    %v945 = vunpack.c.l.b16 %v894
    %v946 = vunpack.c.h.b16 %v894
    %v947 = vunpack.c.l.b16 %v895
    %v948 = vunpack.c.h.b16 %v895
    %v949 = vunpack.c.l.b16 %v896
    %v950 = vunpack.c.h.b16 %v896
    %v951 = vpack.c.b16 %v921, %v919
    %v952 = vpack.c.b16 %v922, %v920
    %v953 = vpack.c.b16 %v925, %v923
    %v954 = vpack.c.b16 %v926, %v924
    %v955 = vpack.c.b16 %v929, %v927
    %v956 = vpack.c.b16 %v930, %v928
    %v957 = vpack.c.b16 %v933, %v931
    %v958 = vpack.c.b16 %v934, %v932
    %v959 = vpack.c.b16 %v937, %v935
    %v960 = vpack.c.b16 %v938, %v936
    %v961 = vpack.c.b16 %v941, %v939
    %v962 = vpack.c.b16 %v942, %v940
    %v963 = vpack.c.b16 %v945, %v943
    %v964 = vpack.c.b16 %v946, %v944
    %v965 = vpack.c.b16 %v949, %v947
    %v966 = vpack.c.b16 %v950, %v948
    %983 = vmatpush.bf16.msra.mxu0 %v965
    %984 = vmatpush.bf16.msra.mxu0 %v963
    %985 = vmatpush.bf16.msra.mxu0 %v961
    %986 = vmatpush.bf16.msra.mxu0 %v959
    %987 = vmatpush.bf16.msra.mxu0 %v957
    %988 = vmatpush.bf16.msra.mxu0 %v955
    %989 = vmatpush.bf16.msra.mxu0 %v953
    %990 = vmatpush.bf16.msra.mxu0 %v951
    %991 = vmatmul.bf16.gmra.mxu0 %v880
    %v992 = vpop.f32.mrf.mxu0
    %v993 = vadd.f32 %v899, %v992
    %v994 = vpop.f32.mrf.mxu0
    %v995 = vadd.f32 %v899, %v994
    %996 = vdwg.mxu0
    %997 = vmatpush.bf16.msra.mxu0 %v966
    %998 = vmatpush.bf16.msra.mxu0 %v964
    %999 = vmatpush.bf16.msra.mxu0 %v962
    %1000 = vmatpush.bf16.msra.mxu0 %v960
    %1001 = vmatpush.bf16.msra.mxu0 %v958
    %1002 = vmatpush.bf16.msra.mxu0 %v956
    %1003 = vmatpush.bf16.msra.mxu0 %v954
    %1004 = vmatpush.bf16.msra.mxu0 %v952
    %1005 = vmatmul.bf16.gmra.mxu0 %v880
    %v1006 = vpop.f32.mrf.mxu0
    %v1007 = vadd.f32 %v900, %v1006
    %v1008 = vpop.f32.mrf.mxu0
    %v1009 = vadd.f32 %v900, %v1008
    %1010 = vdwg.mxu0
    %v1011 = vmul.f32 %v993, 0.5
    %v1012 = vmul.f32 %v1007, 0.5
    %v1013 = vmul.f32 %v995, 0.5
    %v1014 = vmul.f32 %v1009, 0.5
    %v1015 = vmul.f32 %v993, 0.044715
    %v1016 = vmul.f32 %v1007, 0.044715
    %v1017 = vmul.f32 %v995, 0.044715
    %v1018 = vmul.f32 %v1009, 0.044715
    %v1019 = vmul.f32 %v1015, %v993
    %v1020 = vmul.f32 %v1016, %v1007
    %v1021 = vmul.f32 %v1017, %v995
    %v1022 = vmul.f32 %v1018, %v1009
    %v1023 = vmul.f32 %v1019, %v993
    %v1024 = vmul.f32 %v1020, %v1007
    %v1025 = vmul.f32 %v1021, %v995
    %v1026 = vmul.f32 %v1022, %v1009
    %v1027 = vadd.f32 %v993, %v1023
    %v1028 = vadd.f32 %v1007, %v1024
    %v1029 = vadd.f32 %v995, %v1025
    %v1030 = vadd.f32 %v1009, %v1026
    %v1031 = vmul.f32 %v1027, 0.7978846
    %v1032 = vmul.f32 %v1028, 0.7978846
    %v1033 = vmul.f32 %v1029, 0.7978846
    %v1034 = vmul.f32 %v1030, 0.7978846
    %v1035 = vtanh.pop %v1031
    %v1036 = vtanh.pop %v1032
    %v1037 = vtanh.pop %v1033
    %v1038 = vtanh.pop %v1034
    %v1039 = vadd.f32 %v1035, 1.0
    %v1040 = vadd.f32 %v1036, 1.0
    %v1041 = vadd.f32 %v1037, 1.0
    %v1042 = vadd.f32 %v1038, 1.0
    %v1043 = vmul.f32 %v1011, %v1039
    %v1044 = vmul.f32 %v1012, %v1040
    %v1045 = vmul.f32 %v1013, %v1041
    %v1046 = vmul.f32 %v1014, %v1042
    %v1047 = vpack.c.bf16 %v1045, %v1043
    %v1048 = vpack.c.bf16 %v1046, %v1044
    %v1049 = vld [vmem:[%s15] sm:$0xf]
    %v1050 = vld [vmem:[%s15 + $0x4] sm:$0xf]
    %v1051 = vld [vmem:[%s15 + $0x8] sm:$0xf]
    %v1052 = vld [vmem:[%s15 + $0xc] sm:$0xf]
    %v1053 = vld [vmem:[%s15 + $0x10] sm:$0xf]
    %v1054 = vld [vmem:[%s15 + $0x14] sm:$0xf]
    %v1055 = vld [vmem:[%s15 + $0x18] sm:$0xf]
    %v1056 = vld [vmem:[%s15 + $0x1c] sm:$0xf]
    %v1057 = vld [vmem:[%s15 + $0x20] sm:$0xf]
    %v1058 = vld [vmem:[%s15 + $0x24] sm:$0xf]
    %v1059 = vld [vmem:[%s15 + $0x28] sm:$0xf]
    %v1060 = vld [vmem:[%s15 + $0x2c] sm:$0xf]
    %v1061 = vld [vmem:[%s15 + $0x30] sm:$0xf]
    %v1062 = vld [vmem:[%s15 + $0x34] sm:$0xf]
    %v1063 = vld [vmem:[%s15 + $0x38] sm:$0xf]
    %v1064 = vld [vmem:[%s15 + $0x3c] sm:$0xf]
    %v1065 = vld [vmem:[%s15 + $0x40] sm:$0xf]
    %v1066 = vld [vmem:[%s15 + $0x44] sm:$0xf]
    %v1067 = vld [vmem:[%s15 + $0x48] sm:$0xf]
    %v1068 = vld [vmem:[%s15 + $0x4c] sm:$0xf]
    %v1069 = vld [vmem:[%s15 + $0x50] sm:$0xf]
    %v1070 = vld [vmem:[%s15 + $0x54] sm:$0xf]
    %v1071 = vld [vmem:[%s15 + $0x58] sm:$0xf]
    %v1072 = vld [vmem:[%s15 + $0x5c] sm:$0xf]
    %v1073 = vld [vmem:[%s15 + $0x60] sm:$0xf]
    %v1074 = vld [vmem:[%s15 + $0x64] sm:$0xf]
    %v1075 = vld [vmem:[%s15 + $0x68] sm:$0xf]
    %v1076 = vld [vmem:[%s15 + $0x6c] sm:$0xf]
    %v1077 = vld [vmem:[%s15 + $0x70] sm:$0xf]
    %v1078 = vld [vmem:[%s15 + $0x74] sm:$0xf]
    %v1079 = vld [vmem:[%s15 + $0x78] sm:$0xf]
    %v1080 = vld [vmem:[%s15 + $0x7c] sm:$0xf]
    %v1081 = vld [vmem:[%s16] sm:$0x1]
    %v1083 = vperm.slane %v1081, 0
    %v1117 = vunpack.c.l.b16 %v1049
    %v1118 = vunpack.c.l.b16 %v1050
    %v1119 = vunpack.c.l.b16 %v1051
    %v1120 = vunpack.c.l.b16 %v1052
    %v1121 = vunpack.c.l.b16 %v1053
    %v1122 = vunpack.c.l.b16 %v1054
    %v1123 = vunpack.c.l.b16 %v1055
    %v1124 = vunpack.c.l.b16 %v1056
    %v1125 = vunpack.c.l.b16 %v1057
    %v1126 = vunpack.c.l.b16 %v1058
    %v1127 = vunpack.c.l.b16 %v1059
    %v1128 = vunpack.c.l.b16 %v1060
    %v1129 = vunpack.c.l.b16 %v1061
    %v1130 = vunpack.c.l.b16 %v1062
    %v1131 = vunpack.c.l.b16 %v1063
    %v1132 = vunpack.c.l.b16 %v1064
    %v1133 = vunpack.c.l.b16 %v1065
    %v1134 = vunpack.c.l.b16 %v1066
    %v1135 = vunpack.c.l.b16 %v1067
    %v1136 = vunpack.c.l.b16 %v1068
    %v1137 = vunpack.c.l.b16 %v1069
    %v1138 = vunpack.c.l.b16 %v1070
    %v1139 = vunpack.c.l.b16 %v1071
    %v1140 = vunpack.c.l.b16 %v1072
    %v1141 = vunpack.c.l.b16 %v1073
    %v1142 = vunpack.c.l.b16 %v1074
    %v1143 = vunpack.c.l.b16 %v1075
    %v1144 = vunpack.c.l.b16 %v1076
    %v1145 = vunpack.c.l.b16 %v1077
    %v1146 = vunpack.c.l.b16 %v1078
    %v1147 = vunpack.c.l.b16 %v1079
    %v1148 = vunpack.c.l.b16 %v1080
    %v1149 = vpack.c.b16 %v1118, %v1117
    %v1150 = vpack.c.b16 %v1120, %v1119
    %v1151 = vpack.c.b16 %v1122, %v1121
    %v1152 = vpack.c.b16 %v1124, %v1123
    %v1153 = vpack.c.b16 %v1126, %v1125
    %v1154 = vpack.c.b16 %v1128, %v1127
    %v1155 = vpack.c.b16 %v1130, %v1129
    %v1156 = vpack.c.b16 %v1132, %v1131
    %v1157 = vpack.c.b16 %v1134, %v1133
    %v1158 = vpack.c.b16 %v1136, %v1135
    %v1159 = vpack.c.b16 %v1138, %v1137
    %v1160 = vpack.c.b16 %v1140, %v1139
    %v1161 = vpack.c.b16 %v1142, %v1141
    %v1162 = vpack.c.b16 %v1144, %v1143
    %v1163 = vpack.c.b16 %v1146, %v1145
    %v1164 = vpack.c.b16 %v1148, %v1147
    %1181 = vmatpush.bf16.msra.mxu0 %v1156
    %1182 = vmatpush.bf16.msra.mxu0 %v1155
    %1183 = vmatpush.bf16.msra.mxu0 %v1154
    %1184 = vmatpush.bf16.msra.mxu0 %v1153
    %1185 = vmatpush.bf16.msra.mxu0 %v1152
    %1186 = vmatpush.bf16.msra.mxu0 %v1151
    %1187 = vmatpush.bf16.msra.mxu0 %v1150
    %1188 = vmatpush.bf16.msra.mxu0 %v1149
    %1189 = vmatmul.bf16.gmra.mxu0 %v1047
    %v1190 = vpop.f32.mrf.mxu0
    %v1191 = vadd.f32 %v1083, %v1190
    %v1192 = vpop.f32.mrf.mxu0
    %v1193 = vadd.f32 %v1083, %v1192
    %1194 = vdwg.mxu0
    %1195 = vmatpush.bf16.msra.mxu0 %v1164
    %1196 = vmatpush.bf16.msra.mxu0 %v1163
    %1197 = vmatpush.bf16.msra.mxu0 %v1162
    %1198 = vmatpush.bf16.msra.mxu0 %v1161
    %1199 = vmatpush.bf16.msra.mxu0 %v1160
    %1200 = vmatpush.bf16.msra.mxu0 %v1159
    %1201 = vmatpush.bf16.msra.mxu0 %v1158
    %1202 = vmatpush.bf16.msra.mxu0 %v1157
    %1203 = vmatmul.bf16.gmra.mxu0 %v1048
    %v1204 = vpop.f32.mrf.mxu0
    %v1205 = vadd.f32 %v1191, %v1204
    %v1206 = vpop.f32.mrf.mxu0
    %v1207 = vadd.f32 %v1193, %v1206
    %1208 = vdwg.mxu0
    %v1209 = vadd.f32 %v826, %v1205
    %v1210 = vadd.f32 %v827, %v1207
    %1211 = vst [vmem:[#allocation5] sm:$0xff] %v1209
    %1212 = vst [vmem:[#allocation5 + $0x8] sm:$0xff] %v1210
    // Predicated region
    $region74: #{starcoder2_decoder_layer.1} parent=1 // pred_check
      _
    $region75: #{starcoder2_decoder_layer.1} parent=1 // pred_check_branch
      %1214 = sbr.rel (0) target = $region77
    $region76: #{starcoder2_decoder_layer.1} parent=1 // pred_region
      %1216 = vsyncadd [#allocation4], 0
      %s1217 = sshll.u32 [#allocation5], 4
      %s1218 = int_to_ptr.vmem [resolvable:$true] %s1217
      %s1219 = sshll.u32 %s17, 4
      %s1220 = int_to_ptr.hbm [resolvable:$true] %s1219
      %1225 = dma.vmem_to_hbm [thread:$0]  %s1218, 256, %s1220, [#allocation4], 128, 128, 8
    $region77: #{starcoder2_decoder_layer.1} parent=1 // pred_fallthru
      _
    // Predicated region
    $region78: #{starcoder2_decoder_layer.1} parent=1 // pred_check
      _
    $region79: #{starcoder2_decoder_layer.1} parent=1 // pred_check_branch
      %1227 = sbr.rel (0) target = $region81
    $region80: #{starcoder2_decoder_layer.1} parent=1 // pred_region
      %1229 = dma.done [#allocation4], 256
    $region81: #{starcoder2_decoder_layer.1} parent=1 // pred_fallthru
      _
    %1230 = vsyncpa [#allocation3], 1
    %1231 = vsyncpa [#allocation4], 1

</llo_original>
